<compile_context>
chip_gen: v5e
topology: v5e:2x2
jax: 0.10.0
libtpu: 0.0.40
codegen_flags: <defaults>
</compile_context>

<pallas_src>
import functools

import jax
import jax.numpy as jnp
from jax.experimental import pallas as pl
from jax.experimental.pallas import tpu as pltpu

# Module hyper-parameters (from the PyTorch source) -- kept, with a small seq length.
N_EMBD = 384
N_HEADS = 4
HEAD_SIZE = 96          # n_heads * head_size == n_embd (typical config)
BATCH = 2
SEQ = 8                 # T <= block_size (256); causal mask built for T


def _multihead_kernel(x_ref, wqkv_ref, wo_ref, bo_ref, o_ref, *,
                      n_heads, head_size, batch, seq):
    """Single invocation: whole (B*T, C) problem resident in VMEM.

    x_ref    : (B*T, C)          bf16
    wqkv_ref : (C, 3*H*hs)       bf16  [Q heads | K heads | V heads], scale folded
                                        into the Q columns
    wo_ref   : (H*hs, C)         bf16
    bo_ref   : (1, C)            f32
    o_ref    : (B*T, C)          bf16
    """
    H, hs, T, B = n_heads, head_size, seq, batch

    # Fused Q/K/V projection: one lane-dense MXU push (scale already in wq).
    qkv = jnp.dot(x_ref[...], wqkv_ref[...],
                  preferred_element_type=jnp.float32)          # (B*T, 3*H*hs) f32

    # Causal mask (diagonal always allowed -> no all -inf rows).
    row = jax.lax.broadcasted_iota(jnp.int32, (T, T), 0)
    col = jax.lax.broadcasted_iota(jnp.int32, (T, T), 1)
    causal = row >= col

    att_rows = []
    for b in range(B):                                         # tiny static loops,
        r0 = b * T                                             # unrolled at trace time
        head_outs = []
        for h in range(H):
            # Static 96-wide slices of the fused result (sublane-aligned rows).
            q = qkv[r0:r0 + T, h * hs:(h + 1) * hs]                      # (T, hs)
            k = qkv[r0:r0 + T, (H + h) * hs:(H + h + 1) * hs]            # (T, hs)
            v = qkv[r0:r0 + T, (2 * H + h) * hs:(2 * H + h + 1) * hs]    # (T, hs)

            # q @ k.T without materializing the transpose (scale pre-folded).
            wei = jax.lax.dot_general(q, k, (((1,), (1,)), ((), ())),
                                      preferred_element_type=jnp.float32)
            wei = jnp.where(causal, wei, -jnp.inf)

            # Numerically-stable softmax (f32); reciprocal on the EUP.
            m = jnp.max(wei, axis=-1, keepdims=True)
            e = jnp.exp(wei - m)
            p = e * pl.reciprocal(jnp.sum(e, axis=-1, keepdims=True), approx=True)
            # TODO(synk): training-mode dropout on the attention weights not reproduced.

            head_outs.append(jnp.dot(p, v, preferred_element_type=jnp.float32))

        att_rows.append(jnp.concatenate(head_outs, axis=-1))   # (T, H*hs)

    # Single output projection for all batches + single lane-dense store.
    att = jnp.concatenate(att_rows, axis=0).astype(wo_ref.dtype)   # (B*T, H*hs) bf16
    out = jnp.dot(att, wo_ref[...],
                  preferred_element_type=jnp.float32) + bo_ref[...]
    o_ref[...] = out.astype(o_ref.dtype)


def multihead_forward(x, wk, wq, wv, wo, bo, *,
                      n_heads=N_HEADS, head_size=HEAD_SIZE):
    """x: (B, T, C).  wk/wq/wv: (H, C, hs) pre-transposed, wo: (H*hs, C), bo: (1, C)."""
    B, T, C = x.shape
    H, hs = n_heads, head_size

    # ---- host-side packing: fuse Q/K/V (unpadded), fold scale into wq, bf16 ----
    def pack_heads(w):                      # (H, C, hs) -> (C, H*hs)
        return jnp.transpose(w, (1, 0, 2)).reshape(C, H * hs)

    scale = float(head_size) ** -0.5
    wqkv = jnp.concatenate([pack_heads(wq * scale), pack_heads(wk), pack_heads(wv)],
                           axis=-1).astype(jnp.bfloat16)        # (C, 3*H*hs)
    wo_b = wo.astype(jnp.bfloat16)                              # (H*hs, C)
    bo_f32 = bo.astype(jnp.float32)                             # (1, C)
    x_flat = x.reshape(B * T, C).astype(jnp.bfloat16)           # (B*T, C)

    kernel = functools.partial(_multihead_kernel, n_heads=H, head_size=hs,
                               batch=B, seq=T)

    flops = (2 * B * T * C * 3 * H * hs          # fused QKV projection
             + 2 * B * H * T * T * hs * 2        # q@k.T and p@v
             + 2 * B * T * H * hs * C)           # output projection
    bytes_accessed = (x_flat.size * 2 + wqkv.size * 2 + wo_b.size * 2
                      + bo_f32.size * 4 + B * T * C * 2)
    cost = pl.CostEstimate(flops=flops,
                           transcendentals=B * H * T * T,
                           bytes_accessed=bytes_accessed)

    out_flat = pl.pallas_call(
        kernel,
        out_shape=jax.ShapeDtypeStruct((B * T, C), jnp.bfloat16),
        in_specs=[pl.BlockSpec(memory_space=pltpu.MemorySpace.VMEM)] * 4,
        out_specs=pl.BlockSpec(memory_space=pltpu.MemorySpace.VMEM),
        cost_estimate=cost,
    )(x_flat, wqkv, wo_b, bo_f32)

    return out_flat.astype(jnp.float32).reshape(B, T, C)


def _reference(x, wk, wq, wv, wo, bo):
    """Pure-JAX reference with identical math (f32)."""
    B, T, C = x.shape
    outs = []
    for h in range(wk.shape[0]):
        k = x @ wk[h]
        q = x @ wq[h]
        v = x @ wv[h]
        wei = (q @ jnp.swapaxes(k, -2, -1)) * (wk.shape[-1] ** -0.5)
        mask = jnp.tril(jnp.ones((T, T), dtype=bool))
        wei = jnp.where(mask, wei, -jnp.inf)
        wei = jax.nn.softmax(wei, axis=-1)
        outs.append(wei @ v)
    cat = jnp.concatenate(outs, axis=-1)
    return cat @ wo + bo


if __name__ == "__main__":
    key = jax.random.PRNGKey(0)
    k_x, k_wk, k_wq, k_wv, k_wo, k_bo = jax.random.split(key, 6)

    B, T, C, H, hs = BATCH, SEQ, N_EMBD, N_HEADS, HEAD_SIZE

    x = jax.random.normal(k_x, (B, T, C), dtype=jnp.float32)

    # Deterministic synthetic parameters (nn.Linear (out, in) weights pre-transposed).
    wscale = 0.02
    wk = wscale * jax.random.normal(k_wk, (H, C, hs), dtype=jnp.float32)
    wq = wscale * jax.random.normal(k_wq, (H, C, hs), dtype=jnp.float32)
    wv = wscale * jax.random.normal(k_wv, (H, C, hs), dtype=jnp.float32)
    wo = wscale * jax.random.normal(k_wo, (H * hs, C), dtype=jnp.float32)
    bo = wscale * jax.random.normal(k_bo, (1, C), dtype=jnp.float32)

    out = multihead_forward(x, wk, wq, wv, wo, bo)
    out = jax.block_until_ready(out)

    # Reference computed on bf16-quantized inputs (the kernel stores x/weights in
    # bf16 but accumulates in f32), so only internal bf16 rounding remains.
    q16 = lambda a: a.astype(jnp.bfloat16).astype(jnp.float32)
    ref = _reference(q16(x), q16(wk), q16(wq), q16(wv), q16(wo), bo[0])

    assert out.shape == (B, T, C), out.shape
    err = float(jnp.max(jnp.abs(out - ref)))
    assert jnp.allclose(out, ref, atol=2e-2, rtol=2e-2), err

    print("KERNEL_OK")
</pallas_src>

<mosaic_0001>
module attributes {stable_mosaic.version = 11 : i64} {
  func.func @_multihead_kernel(%arg0: memref<16x384xbf16, #tpu.memory_space<vmem>>, %arg1: memref<384x1152xbf16, #tpu.memory_space<vmem>>, %arg2: memref<384x384xbf16, #tpu.memory_space<vmem>>, %arg3: memref<1x384xf32, #tpu.memory_space<vmem>>, %arg4: memref<16x384xbf16, #tpu.memory_space<vmem>>) attributes {dimension_semantics = [], scalar_prefetch = 0 : i64, scratch_operands = 0 : i64, tpu.core_type = #tpu.core_type<tc>} {
    %c0 = arith.constant 0 : index
    %c0_0 = arith.constant 0 : index
    %0 = vector.load %arg0[%c0, %c0_0] : memref<16x384xbf16, #tpu.memory_space<vmem>>, vector<16x384xbf16>
    %c0_1 = arith.constant 0 : index
    %c0_2 = arith.constant 0 : index
    %1 = vector.load %arg1[%c0_1, %c0_2] : memref<384x1152xbf16, #tpu.memory_space<vmem>>, vector<384x1152xbf16>
    %cst = arith.constant dense<0.000000e+00> : vector<16x1152xf32>
    %2 = tpu.matmul %0, %1, %cst {dimension_numbers = #tpu.dot_dimension_numbers<[1], [0], [0], [1], [0, 0, 1, 1], [], []>} : vector<16x384xbf16>, vector<384x1152xbf16>, vector<16x1152xf32> -> vector<16x1152xf32>
    %3 = tpu.iota {dimensions = array<i32: 0>} : vector<8x8xi32>
    %4 = tpu.iota {dimensions = array<i32: 1>} : vector<8x8xi32>
    %5 = arith.cmpi sge, %3, %4 : vector<8x8xi32>
    %6 = vector.extract_strided_slice %2 {offsets = [0, 0], sizes = [8, 96], strides = [1, 1]} : vector<16x1152xf32> to vector<8x96xf32>
    %7 = vector.extract_strided_slice %2 {offsets = [0, 384], sizes = [8, 96], strides = [1, 1]} : vector<16x1152xf32> to vector<8x96xf32>
    %8 = vector.extract_strided_slice %2 {offsets = [0, 768], sizes = [8, 96], strides = [1, 1]} : vector<16x1152xf32> to vector<8x96xf32>
    %cst_3 = arith.constant dense<0.000000e+00> : vector<8x8xf32>
    %9 = tpu.matmul %6, %7, %cst_3 {dimension_numbers = #tpu.dot_dimension_numbers<[1], [1], [0], [0], [0, 0, 1, 0], [], []>} : vector<8x96xf32>, vector<8x96xf32>, vector<8x8xf32> -> vector<8x8xf32>
    %cst_4 = arith.constant 0xFF800000 : f32
    %10 = vector.broadcast %cst_4 : f32 to vector<8x8xf32>
    %11 = arith.select %5, %9, %10 : vector<8x8xi1>, vector<8x8xf32>
    %cst_5 = arith.constant dense<0xFF800000> : vector<8xf32>
    %12 = vector.multi_reduction <maximumf>, %11, %cst_5 [1] : vector<8x8xf32> to vector<8xf32>
    %13 = vector.shape_cast %12 : vector<8xf32> to vector<8x1xf32>
    %14 = vector.broadcast %13 : vector<8x1xf32> to vector<8x8xf32>
    %15 = arith.subf %11, %14 : vector<8x8xf32>
    %16 = math.exp %15 : vector<8x8xf32>
    %cst_6 = arith.constant dense<0.000000e+00> : vector<8xf32>
    %17 = vector.multi_reduction <add>, %16, %cst_6 [1] : vector<8x8xf32> to vector<8xf32>
    %18 = vector.shape_cast %17 : vector<8xf32> to vector<8x1xf32>
    %19 = tpu.reciprocal %18 {approx = true} : vector<8x1xf32> -> vector<8x1xf32>
    %20 = vector.broadcast %19 : vector<8x1xf32> to vector<8x8xf32>
    %21 = arith.mulf %16, %20 : vector<8x8xf32>
    %cst_7 = arith.constant dense<0.000000e+00> : vector<8x96xf32>
    %22 = tpu.matmul %21, %8, %cst_7 {dimension_numbers = #tpu.dot_dimension_numbers<[1], [0], [0], [1], [0, 0, 1, 1], [], []>} : vector<8x8xf32>, vector<8x96xf32>, vector<8x96xf32> -> vector<8x96xf32>
    %23 = vector.extract_strided_slice %2 {offsets = [0, 96], sizes = [8, 96], strides = [1, 1]} : vector<16x1152xf32> to vector<8x96xf32>
    %24 = vector.extract_strided_slice %2 {offsets = [0, 480], sizes = [8, 96], strides = [1, 1]} : vector<16x1152xf32> to vector<8x96xf32>
    %25 = vector.extract_strided_slice %2 {offsets = [0, 864], sizes = [8, 96], strides = [1, 1]} : vector<16x1152xf32> to vector<8x96xf32>
    %cst_8 = arith.constant dense<0.000000e+00> : vector<8x8xf32>
    %26 = tpu.matmul %23, %24, %cst_8 {dimension_numbers = #tpu.dot_dimension_numbers<[1], [1], [0], [0], [0, 0, 1, 0], [], []>} : vector<8x96xf32>, vector<8x96xf32>, vector<8x8xf32> -> vector<8x8xf32>
    %cst_9 = arith.constant 0xFF800000 : f32
    %27 = vector.broadcast %cst_9 : f32 to vector<8x8xf32>
    %28 = arith.select %5, %26, %27 : vector<8x8xi1>, vector<8x8xf32>
    %cst_10 = arith.constant dense<0xFF800000> : vector<8xf32>
    %29 = vector.multi_reduction <maximumf>, %28, %cst_10 [1] : vector<8x8xf32> to vector<8xf32>
    %30 = vector.shape_cast %29 : vector<8xf32> to vector<8x1xf32>
    %31 = vector.broadcast %30 : vector<8x1xf32> to vector<8x8xf32>
    %32 = arith.subf %28, %31 : vector<8x8xf32>
    %33 = math.exp %32 : vector<8x8xf32>
    %cst_11 = arith.constant dense<0.000000e+00> : vector<8xf32>
    %34 = vector.multi_reduction <add>, %33, %cst_11 [1] : vector<8x8xf32> to vector<8xf32>
    %35 = vector.shape_cast %34 : vector<8xf32> to vector<8x1xf32>
    %36 = tpu.reciprocal %35 {approx = true} : vector<8x1xf32> -> vector<8x1xf32>
    %37 = vector.broadcast %36 : vector<8x1xf32> to vector<8x8xf32>
    %38 = arith.mulf %33, %37 : vector<8x8xf32>
    %cst_12 = arith.constant dense<0.000000e+00> : vector<8x96xf32>
    %39 = tpu.matmul %38, %25, %cst_12 {dimension_numbers = #tpu.dot_dimension_numbers<[1], [0], [0], [1], [0, 0, 1, 1], [], []>} : vector<8x8xf32>, vector<8x96xf32>, vector<8x96xf32> -> vector<8x96xf32>
    %40 = vector.extract_strided_slice %2 {offsets = [0, 192], sizes = [8, 96], strides = [1, 1]} : vector<16x1152xf32> to vector<8x96xf32>
    %41 = vector.extract_strided_slice %2 {offsets = [0, 576], sizes = [8, 96], strides = [1, 1]} : vector<16x1152xf32> to vector<8x96xf32>
    %42 = vector.extract_strided_slice %2 {offsets = [0, 960], sizes = [8, 96], strides = [1, 1]} : vector<16x1152xf32> to vector<8x96xf32>
    %cst_13 = arith.constant dense<0.000000e+00> : vector<8x8xf32>
    %43 = tpu.matmul %40, %41, %cst_13 {dimension_numbers = #tpu.dot_dimension_numbers<[1], [1], [0], [0], [0, 0, 1, 0], [], []>} : vector<8x96xf32>, vector<8x96xf32>, vector<8x8xf32> -> vector<8x8xf32>
    %cst_14 = arith.constant 0xFF800000 : f32
    %44 = vector.broadcast %cst_14 : f32 to vector<8x8xf32>
    %45 = arith.select %5, %43, %44 : vector<8x8xi1>, vector<8x8xf32>
    %cst_15 = arith.constant dense<0xFF800000> : vector<8xf32>
    %46 = vector.multi_reduction <maximumf>, %45, %cst_15 [1] : vector<8x8xf32> to vector<8xf32>
    %47 = vector.shape_cast %46 : vector<8xf32> to vector<8x1xf32>
    %48 = vector.broadcast %47 : vector<8x1xf32> to vector<8x8xf32>
    %49 = arith.subf %45, %48 : vector<8x8xf32>
    %50 = math.exp %49 : vector<8x8xf32>
    %cst_16 = arith.constant dense<0.000000e+00> : vector<8xf32>
    %51 = vector.multi_reduction <add>, %50, %cst_16 [1] : vector<8x8xf32> to vector<8xf32>
    %52 = vector.shape_cast %51 : vector<8xf32> to vector<8x1xf32>
    %53 = tpu.reciprocal %52 {approx = true} : vector<8x1xf32> -> vector<8x1xf32>
    %54 = vector.broadcast %53 : vector<8x1xf32> to vector<8x8xf32>
    %55 = arith.mulf %50, %54 : vector<8x8xf32>
    %cst_17 = arith.constant dense<0.000000e+00> : vector<8x96xf32>
    %56 = tpu.matmul %55, %42, %cst_17 {dimension_numbers = #tpu.dot_dimension_numbers<[1], [0], [0], [1], [0, 0, 1, 1], [], []>} : vector<8x8xf32>, vector<8x96xf32>, vector<8x96xf32> -> vector<8x96xf32>
    %57 = vector.extract_strided_slice %2 {offsets = [0, 288], sizes = [8, 96], strides = [1, 1]} : vector<16x1152xf32> to vector<8x96xf32>
    %58 = vector.extract_strided_slice %2 {offsets = [0, 672], sizes = [8, 96], strides = [1, 1]} : vector<16x1152xf32> to vector<8x96xf32>
    %59 = vector.extract_strided_slice %2 {offsets = [0, 1056], sizes = [8, 96], strides = [1, 1]} : vector<16x1152xf32> to vector<8x96xf32>
    %cst_18 = arith.constant dense<0.000000e+00> : vector<8x8xf32>
    %60 = tpu.matmul %57, %58, %cst_18 {dimension_numbers = #tpu.dot_dimension_numbers<[1], [1], [0], [0], [0, 0, 1, 0], [], []>} : vector<8x96xf32>, vector<8x96xf32>, vector<8x8xf32> -> vector<8x8xf32>
    %cst_19 = arith.constant 0xFF800000 : f32
    %61 = vector.broadcast %cst_19 : f32 to vector<8x8xf32>
    %62 = arith.select %5, %60, %61 : vector<8x8xi1>, vector<8x8xf32>
    %cst_20 = arith.constant dense<0xFF800000> : vector<8xf32>
    %63 = vector.multi_reduction <maximumf>, %62, %cst_20 [1] : vector<8x8xf32> to vector<8xf32>
    %64 = vector.shape_cast %63 : vector<8xf32> to vector<8x1xf32>
    %65 = vector.broadcast %64 : vector<8x1xf32> to vector<8x8xf32>
    %66 = arith.subf %62, %65 : vector<8x8xf32>
    %67 = math.exp %66 : vector<8x8xf32>
    %cst_21 = arith.constant dense<0.000000e+00> : vector<8xf32>
    %68 = vector.multi_reduction <add>, %67, %cst_21 [1] : vector<8x8xf32> to vector<8xf32>
    %69 = vector.shape_cast %68 : vector<8xf32> to vector<8x1xf32>
    %70 = tpu.reciprocal %69 {approx = true} : vector<8x1xf32> -> vector<8x1xf32>
    %71 = vector.broadcast %70 : vector<8x1xf32> to vector<8x8xf32>
    %72 = arith.mulf %67, %71 : vector<8x8xf32>
    %cst_22 = arith.constant dense<0.000000e+00> : vector<8x96xf32>
    %73 = tpu.matmul %72, %59, %cst_22 {dimension_numbers = #tpu.dot_dimension_numbers<[1], [0], [0], [1], [0, 0, 1, 1], [], []>} : vector<8x8xf32>, vector<8x96xf32>, vector<8x96xf32> -> vector<8x96xf32>
    %74 = tpu.concatenate %22, %39, %56, %73 in 1 : vector<8x96xf32>, vector<8x96xf32>, vector<8x96xf32>, vector<8x96xf32> -> vector<8x384xf32>
    %75 = vector.extract_strided_slice %2 {offsets = [8, 0], sizes = [8, 96], strides = [1, 1]} : vector<16x1152xf32> to vector<8x96xf32>
    %76 = vector.extract_strided_slice %2 {offsets = [8, 384], sizes = [8, 96], strides = [1, 1]} : vector<16x1152xf32> to vector<8x96xf32>
    %77 = vector.extract_strided_slice %2 {offsets = [8, 768], sizes = [8, 96], strides = [1, 1]} : vector<16x1152xf32> to vector<8x96xf32>
    %cst_23 = arith.constant dense<0.000000e+00> : vector<8x8xf32>
    %78 = tpu.matmul %75, %76, %cst_23 {dimension_numbers = #tpu.dot_dimension_numbers<[1], [1], [0], [0], [0, 0, 1, 0], [], []>} : vector<8x96xf32>, vector<8x96xf32>, vector<8x8xf32> -> vector<8x8xf32>
    %cst_24 = arith.constant 0xFF800000 : f32
    %79 = vector.broadcast %cst_24 : f32 to vector<8x8xf32>
    %80 = arith.select %5, %78, %79 : vector<8x8xi1>, vector<8x8xf32>
    %cst_25 = arith.constant dense<0xFF800000> : vector<8xf32>
    %81 = vector.multi_reduction <maximumf>, %80, %cst_25 [1] : vector<8x8xf32> to vector<8xf32>
    %82 = vector.shape_cast %81 : vector<8xf32> to vector<8x1xf32>
    %83 = vector.broadcast %82 : vector<8x1xf32> to vector<8x8xf32>
    %84 = arith.subf %80, %83 : vector<8x8xf32>
    %85 = math.exp %84 : vector<8x8xf32>
    %cst_26 = arith.constant dense<0.000000e+00> : vector<8xf32>
    %86 = vector.multi_reduction <add>, %85, %cst_26 [1] : vector<8x8xf32> to vector<8xf32>
    %87 = vector.shape_cast %86 : vector<8xf32> to vector<8x1xf32>
    %88 = tpu.reciprocal %87 {approx = true} : vector<8x1xf32> -> vector<8x1xf32>
    %89 = vector.broadcast %88 : vector<8x1xf32> to vector<8x8xf32>
    %90 = arith.mulf %85, %89 : vector<8x8xf32>
    %cst_27 = arith.constant dense<0.000000e+00> : vector<8x96xf32>
    %91 = tpu.matmul %90, %77, %cst_27 {dimension_numbers = #tpu.dot_dimension_numbers<[1], [0], [0], [1], [0, 0, 1, 1], [], []>} : vector<8x8xf32>, vector<8x96xf32>, vector<8x96xf32> -> vector<8x96xf32>
    %92 = vector.extract_strided_slice %2 {offsets = [8, 96], sizes = [8, 96], strides = [1, 1]} : vector<16x1152xf32> to vector<8x96xf32>
    %93 = vector.extract_strided_slice %2 {offsets = [8, 480], sizes = [8, 96], strides = [1, 1]} : vector<16x1152xf32> to vector<8x96xf32>
    %94 = vector.extract_strided_slice %2 {offsets = [8, 864], sizes = [8, 96], strides = [1, 1]} : vector<16x1152xf32> to vector<8x96xf32>
    %cst_28 = arith.constant dense<0.000000e+00> : vector<8x8xf32>
    %95 = tpu.matmul %92, %93, %cst_28 {dimension_numbers = #tpu.dot_dimension_numbers<[1], [1], [0], [0], [0, 0, 1, 0], [], []>} : vector<8x96xf32>, vector<8x96xf32>, vector<8x8xf32> -> vector<8x8xf32>
    %cst_29 = arith.constant 0xFF800000 : f32
    %96 = vector.broadcast %cst_29 : f32 to vector<8x8xf32>
    %97 = arith.select %5, %95, %96 : vector<8x8xi1>, vector<8x8xf32>
    %cst_30 = arith.constant dense<0xFF800000> : vector<8xf32>
    %98 = vector.multi_reduction <maximumf>, %97, %cst_30 [1] : vector<8x8xf32> to vector<8xf32>
    %99 = vector.shape_cast %98 : vector<8xf32> to vector<8x1xf32>
    %100 = vector.broadcast %99 : vector<8x1xf32> to vector<8x8xf32>
    %101 = arith.subf %97, %100 : vector<8x8xf32>
    %102 = math.exp %101 : vector<8x8xf32>
    %cst_31 = arith.constant dense<0.000000e+00> : vector<8xf32>
    %103 = vector.multi_reduction <add>, %102, %cst_31 [1] : vector<8x8xf32> to vector<8xf32>
    %104 = vector.shape_cast %103 : vector<8xf32> to vector<8x1xf32>
    %105 = tpu.reciprocal %104 {approx = true} : vector<8x1xf32> -> vector<8x1xf32>
    %106 = vector.broadcast %105 : vector<8x1xf32> to vector<8x8xf32>
    %107 = arith.mulf %102, %106 : vector<8x8xf32>
    %cst_32 = arith.constant dense<0.000000e+00> : vector<8x96xf32>
    %108 = tpu.matmul %107, %94, %cst_32 {dimension_numbers = #tpu.dot_dimension_numbers<[1], [0], [0], [1], [0, 0, 1, 1], [], []>} : vector<8x8xf32>, vector<8x96xf32>, vector<8x96xf32> -> vector<8x96xf32>
    %109 = vector.extract_strided_slice %2 {offsets = [8, 192], sizes = [8, 96], strides = [1, 1]} : vector<16x1152xf32> to vector<8x96xf32>
    %110 = vector.extract_strided_slice %2 {offsets = [8, 576], sizes = [8, 96], strides = [1, 1]} : vector<16x1152xf32> to vector<8x96xf32>
    %111 = vector.extract_strided_slice %2 {offsets = [8, 960], sizes = [8, 96], strides = [1, 1]} : vector<16x1152xf32> to vector<8x96xf32>
    %cst_33 = arith.constant dense<0.000000e+00> : vector<8x8xf32>
    %112 = tpu.matmul %109, %110, %cst_33 {dimension_numbers = #tpu.dot_dimension_numbers<[1], [1], [0], [0], [0, 0, 1, 0], [], []>} : vector<8x96xf32>, vector<8x96xf32>, vector<8x8xf32> -> vector<8x8xf32>
    %cst_34 = arith.constant 0xFF800000 : f32
    %113 = vector.broadcast %cst_34 : f32 to vector<8x8xf32>
    %114 = arith.select %5, %112, %113 : vector<8x8xi1>, vector<8x8xf32>
    %cst_35 = arith.constant dense<0xFF800000> : vector<8xf32>
    %115 = vector.multi_reduction <maximumf>, %114, %cst_35 [1] : vector<8x8xf32> to vector<8xf32>
    %116 = vector.shape_cast %115 : vector<8xf32> to vector<8x1xf32>
    %117 = vector.broadcast %116 : vector<8x1xf32> to vector<8x8xf32>
    %118 = arith.subf %114, %117 : vector<8x8xf32>
    %119 = math.exp %118 : vector<8x8xf32>
    %cst_36 = arith.constant dense<0.000000e+00> : vector<8xf32>
    %120 = vector.multi_reduction <add>, %119, %cst_36 [1] : vector<8x8xf32> to vector<8xf32>
    %121 = vector.shape_cast %120 : vector<8xf32> to vector<8x1xf32>
    %122 = tpu.reciprocal %121 {approx = true} : vector<8x1xf32> -> vector<8x1xf32>
    %123 = vector.broadcast %122 : vector<8x1xf32> to vector<8x8xf32>
    %124 = arith.mulf %119, %123 : vector<8x8xf32>
    %cst_37 = arith.constant dense<0.000000e+00> : vector<8x96xf32>
    %125 = tpu.matmul %124, %111, %cst_37 {dimension_numbers = #tpu.dot_dimension_numbers<[1], [0], [0], [1], [0, 0, 1, 1], [], []>} : vector<8x8xf32>, vector<8x96xf32>, vector<8x96xf32> -> vector<8x96xf32>
    %126 = vector.extract_strided_slice %2 {offsets = [8, 288], sizes = [8, 96], strides = [1, 1]} : vector<16x1152xf32> to vector<8x96xf32>
    %127 = vector.extract_strided_slice %2 {offsets = [8, 672], sizes = [8, 96], strides = [1, 1]} : vector<16x1152xf32> to vector<8x96xf32>
    %128 = vector.extract_strided_slice %2 {offsets = [8, 1056], sizes = [8, 96], strides = [1, 1]} : vector<16x1152xf32> to vector<8x96xf32>
    %cst_38 = arith.constant dense<0.000000e+00> : vector<8x8xf32>
    %129 = tpu.matmul %126, %127, %cst_38 {dimension_numbers = #tpu.dot_dimension_numbers<[1], [1], [0], [0], [0, 0, 1, 0], [], []>} : vector<8x96xf32>, vector<8x96xf32>, vector<8x8xf32> -> vector<8x8xf32>
    %cst_39 = arith.constant 0xFF800000 : f32
    %130 = vector.broadcast %cst_39 : f32 to vector<8x8xf32>
    %131 = arith.select %5, %129, %130 : vector<8x8xi1>, vector<8x8xf32>
    %cst_40 = arith.constant dense<0xFF800000> : vector<8xf32>
    %132 = vector.multi_reduction <maximumf>, %131, %cst_40 [1] : vector<8x8xf32> to vector<8xf32>
    %133 = vector.shape_cast %132 : vector<8xf32> to vector<8x1xf32>
    %134 = vector.broadcast %133 : vector<8x1xf32> to vector<8x8xf32>
    %135 = arith.subf %131, %134 : vector<8x8xf32>
    %136 = math.exp %135 : vector<8x8xf32>
    %cst_41 = arith.constant dense<0.000000e+00> : vector<8xf32>
    %137 = vector.multi_reduction <add>, %136, %cst_41 [1] : vector<8x8xf32> to vector<8xf32>
    %138 = vector.shape_cast %137 : vector<8xf32> to vector<8x1xf32>
    %139 = tpu.reciprocal %138 {approx = true} : vector<8x1xf32> -> vector<8x1xf32>
    %140 = vector.broadcast %139 : vector<8x1xf32> to vector<8x8xf32>
    %141 = arith.mulf %136, %140 : vector<8x8xf32>
    %cst_42 = arith.constant dense<0.000000e+00> : vector<8x96xf32>
    %142 = tpu.matmul %141, %128, %cst_42 {dimension_numbers = #tpu.dot_dimension_numbers<[1], [0], [0], [1], [0, 0, 1, 1], [], []>} : vector<8x8xf32>, vector<8x96xf32>, vector<8x96xf32> -> vector<8x96xf32>
    %143 = tpu.concatenate %91, %108, %125, %142 in 1 : vector<8x96xf32>, vector<8x96xf32>, vector<8x96xf32>, vector<8x96xf32> -> vector<8x384xf32>
    %144 = tpu.concatenate %74, %143 in 0 : vector<8x384xf32>, vector<8x384xf32> -> vector<16x384xf32>
    %145 = arith.truncf %144 : vector<16x384xf32> to vector<16x384xbf16>
    %c0_43 = arith.constant 0 : index
    %c0_44 = arith.constant 0 : index
    %146 = vector.load %arg2[%c0_43, %c0_44] : memref<384x384xbf16, #tpu.memory_space<vmem>>, vector<384x384xbf16>
    %cst_45 = arith.constant dense<0.000000e+00> : vector<16x384xf32>
    %147 = tpu.matmul %145, %146, %cst_45 {dimension_numbers = #tpu.dot_dimension_numbers<[1], [0], [0], [1], [0, 0, 1, 1], [], []>} : vector<16x384xbf16>, vector<384x384xbf16>, vector<16x384xf32> -> vector<16x384xf32>
    %c0_46 = arith.constant 0 : index
    %c0_47 = arith.constant 0 : index
    %148 = vector.load %arg3[%c0_46, %c0_47] : memref<1x384xf32, #tpu.memory_space<vmem>>, vector<1x384xf32>
    %149 = vector.broadcast %148 : vector<1x384xf32> to vector<16x384xf32>
    %150 = arith.addf %147, %149 : vector<16x384xf32>
    %151 = arith.truncf %150 : vector<16x384xf32> to vector<16x384xbf16>
    %c0_48 = arith.constant 0 : index
    %c0_49 = arith.constant 0 : index
    %152 = vector.load %arg4[%c0_48, %c0_49] : memref<16x384xbf16, #tpu.memory_space<vmem>>, vector<16x384xbf16>
    tpu.vector_store %arg4[%c0_48, %c0_49], %151 {strides = array<i32>} : memref<16x384xbf16, #tpu.memory_space<vmem>>, vector<16x384xbf16>,
    return
  }
}

</mosaic_0001>

<llo_original>
// kernel: tpu_custom_call.1
$region0: #{tpu_custom_call.1}
  #allocation0 [shape = 'u32[]', space=smem, size = 0x4, offset = 0x4, fixed_abs, tag = 'smem constant byte address 0x4 - core index']
  #allocation1 [shape = 'u32[72,128]{1,0:T(1,128)}', space=vmem, size = 0x9000, scoped, tag = 'internal scratch']
  %s0 = inlined_call_operand.hbm [shape: bf16[16,384], index: 0, kind: input, shape index: {}]
  %s1 = inlined_call_operand.hbm [shape: bf16[384,1152], index: 1, kind: input, shape index: {}]
  %s2 = inlined_call_operand.hbm [shape: bf16[384,384], index: 2, kind: input, shape index: {}]
  %s3 = inlined_call_operand.hbm [shape: f32[1,384], index: 3, kind: input, shape index: {}]
  %s4 = inlined_call_operand.hbm [shape: bf16[16,384], index: 4, kind: output, shape index: {}]
  %s5 = sld [smem:[#allocation0]]
  $region42: #{tpu_custom_call.1} parent=0
    _
  %s7 = ssub.s32 1, %s5
  %s8 = scalar_select 0, %s7, %s5
  $region1: #{tpu_custom_call.1} parent=0
    #allocation2 [shape = 'u8[12288]{0}', space=vmem, size = 0x3000, scoped, tag = 'input window, operand 0, single buffered']
    #allocation3 [shape = 's32[1]{0}', space=sflag, size = 0x4, scoped, tag = 'scoped memory for tpu_custom_call.1']
    #allocation4 [shape = 's32[1]{0}', space=sflag, size = 0x4, scoped, tag = 'scoped memory for tpu_custom_call.1']
    #allocation5 [shape = 'u8[884736]{0}', space=vmem, size = 0xd8000, scoped, tag = 'input window, operand 1, single buffered']
    #allocation6 [shape = 's32[1]{0}', space=sflag, size = 0x4, scoped, tag = 'scoped memory for tpu_custom_call.1']
    #allocation7 [shape = 'u8[294912]{0}', space=vmem, size = 0x48000, scoped, tag = 'input window, operand 2, single buffered']
    #allocation8 [shape = 'u8[1536]{0}', space=vmem, size = 0x800, scoped, tag = 'input window, operand 3, single buffered']
    #allocation9 [shape = 's32[1]{0}', space=sflag, size = 0x4, scoped, tag = 'scoped memory for tpu_custom_call.1']
    #allocation10 [shape = 'u8[12288]{0}', space=vmem, size = 0x3000, scoped, tag = 'output window, operand 0, single buffered']
    %9 = vsyncpa [#allocation3], 0
    %10 = vsyncpa [#allocation6], 0
    %11 = vsyncpa [#allocation9], 0
    %12 = vsyncpa [#allocation4], 0
    // Predicated region
    $region2: #{tpu_custom_call.1} parent=1 // pred_check
      _
    $region3: #{tpu_custom_call.1} parent=1 // pred_check_branch
      %14 = sbr.rel (0) target = $region5
    $region4: #{tpu_custom_call.1} parent=1 // pred_region
      %16 = vsyncadd [#allocation3], 0
      %s17 = sshll.u32 %s0, 4
      %s18 = int_to_ptr.hbm [resolvable:$true] %s17
      %s19 = sshll.u32 [#allocation2], 4
      %s20 = int_to_ptr.vmem [resolvable:$true] %s19
      %25 = dma.hbm_to_vmem [thread:$0]  %s18, 384, %s20, [#allocation3], 192, 192, 12
    $region5: #{tpu_custom_call.1} parent=1 // pred_fallthru
      _
    // Predicated region
    $region6: #{tpu_custom_call.1} parent=1 // pred_check
      _
    $region7: #{tpu_custom_call.1} parent=1 // pred_check_branch
      %27 = sbr.rel (0) target = $region9
    $region8: #{tpu_custom_call.1} parent=1 // pred_region
      %29 = vsyncadd [#allocation6], 0
      %s30 = sshll.u32 %s1, 4
      %s31 = int_to_ptr.hbm [resolvable:$true] %s30
      %s32 = sshll.u32 [#allocation5], 4
      %s33 = int_to_ptr.vmem [resolvable:$true] %s32
      %38 = dma.hbm_to_vmem [thread:$0]  %s31, 27648, %s33, [#allocation6], 576, 576, 36
    $region9: #{tpu_custom_call.1} parent=1 // pred_fallthru
      _
    // Predicated region
    $region10: #{tpu_custom_call.1} parent=1 // pred_check
      _
    $region11: #{tpu_custom_call.1} parent=1 // pred_check_branch
      %40 = sbr.rel (0) target = $region13
    $region12: #{tpu_custom_call.1} parent=1 // pred_region
      %42 = vsyncadd [#allocation6], 0
      %s43 = sshll.u32 %s2, 4
      %s44 = int_to_ptr.hbm [resolvable:$true] %s43
      %s45 = sshll.u32 [#allocation7], 4
      %s46 = int_to_ptr.vmem [resolvable:$true] %s45
      %51 = dma.hbm_to_vmem [thread:$0]  %s44, 9216, %s46, [#allocation6], 192, 192, 12
    $region13: #{tpu_custom_call.1} parent=1 // pred_fallthru
      _
    // Predicated region
    $region14: #{tpu_custom_call.1} parent=1 // pred_check
      _
    $region15: #{tpu_custom_call.1} parent=1 // pred_check_branch
      %53 = sbr.rel (0) target = $region17
    $region16: #{tpu_custom_call.1} parent=1 // pred_region
      %55 = vsyncadd [#allocation9], 0
      %s57 = sshll.u32 %s3, 4
      %s58 = int_to_ptr.hbm [resolvable:$true] %s57
      %s59 = sshll.u32 [#allocation8], 4
      %s60 = int_to_ptr.vmem [resolvable:$true] %s59
      %62 = dma.hbm_to_vmem [thread:$0]  %s58, 48, %s60, [#allocation9]
    $region17: #{tpu_custom_call.1} parent=1 // pred_fallthru
      _
    // Predicated region
    $region18: #{tpu_custom_call.1} parent=1 // pred_check
      _
    $region19: #{tpu_custom_call.1} parent=1 // pred_check_branch
      %64 = sbr.rel (0) target = $region21
    $region20: #{tpu_custom_call.1} parent=1 // pred_region
      %66 = dma.done [#allocation3], 384
    $region21: #{tpu_custom_call.1} parent=1 // pred_fallthru
      _
    // Predicated region
    $region22: #{tpu_custom_call.1} parent=1 // pred_check
      _
    $region23: #{tpu_custom_call.1} parent=1 // pred_check_branch
      %68 = sbr.rel (0) target = $region25
    $region24: #{tpu_custom_call.1} parent=1 // pred_region
      %70 = dma.done [#allocation6], 27648
    $region25: #{tpu_custom_call.1} parent=1 // pred_fallthru
      _
    // Predicated region
    $region26: #{tpu_custom_call.1} parent=1 // pred_check
      _
    $region27: #{tpu_custom_call.1} parent=1 // pred_check_branch
      %72 = sbr.rel (0) target = $region29
    $region28: #{tpu_custom_call.1} parent=1 // pred_region
      %74 = dma.done [#allocation6], 9216
    $region29: #{tpu_custom_call.1} parent=1 // pred_fallthru
      _
    // Predicated region
    $region30: #{tpu_custom_call.1} parent=1 // pred_check
      _
    $region31: #{tpu_custom_call.1} parent=1 // pred_check_branch
      %76 = sbr.rel (0) target = $region33
    $region32: #{tpu_custom_call.1} parent=1 // pred_region
      %78 = dma.done [#allocation9], 48
    $region33: #{tpu_custom_call.1} parent=1 // pred_fallthru
      _
    %v79 = vld [vmem:[#allocation2] sm:$0xff]
    %v80 = vld [vmem:[#allocation2 + $0x8] sm:$0xf]
    %v81 = vld [vmem:[#allocation2 + $0xc] sm:$0xff]
    %v82 = vld [vmem:[#allocation2 + $0x14] sm:$0xf]
    %v83 = vld [vmem:[#allocation5] sm:$0xff]
    %v84 = vld [vmem:[#allocation5 + $0x8] sm:$0xff]
    %v85 = vld [vmem:[#allocation5 + $0x10] sm:$0xff]
    %v86 = vld [vmem:[#allocation5 + $0x18] sm:$0xff]
    %v87 = vld [vmem:[#allocation5 + $0x20] sm:$0xf]
    %v88 = vld [vmem:[#allocation5 + $0x24] sm:$0xff]
    %v89 = vld [vmem:[#allocation5 + $0x2c] sm:$0xff]
    %v90 = vld [vmem:[#allocation5 + $0x34] sm:$0xff]
    %v91 = vld [vmem:[#allocation5 + $0x3c] sm:$0xff]
    %v92 = vld [vmem:[#allocation5 + $0x44] sm:$0xf]
    %v93 = vld [vmem:[#allocation5 + $0x48] sm:$0xff]
    %v94 = vld [vmem:[#allocation5 + $0x50] sm:$0xff]
    %v95 = vld [vmem:[#allocation5 + $0x58] sm:$0xff]
    %v96 = vld [vmem:[#allocation5 + $0x60] sm:$0xff]
    %v97 = vld [vmem:[#allocation5 + $0x68] sm:$0xf]
    %v98 = vld [vmem:[#allocation5 + $0x6c] sm:$0xff]
    %v99 = vld [vmem:[#allocation5 + $0x74] sm:$0xff]
    %v100 = vld [vmem:[#allocation5 + $0x7c] sm:$0xff]
    %v101 = vld [vmem:[#allocation5 + $0x84] sm:$0xff]
    %v102 = vld [vmem:[#allocation5 + $0x8c] sm:$0xf]
    %v103 = vld [vmem:[#allocation5 + $0x90] sm:$0xff]
    %v104 = vld [vmem:[#allocation5 + $0x98] sm:$0xff]
    %v105 = vld [vmem:[#allocation5 + $0xa0] sm:$0xff]
    %v106 = vld [vmem:[#allocation5 + $0xa8] sm:$0xff]
    %v107 = vld [vmem:[#allocation5 + $0xb0] sm:$0xf]
    %v108 = vld [vmem:[#allocation5 + $0xb4] sm:$0xff]
    %v109 = vld [vmem:[#allocation5 + $0xbc] sm:$0xff]
    %v110 = vld [vmem:[#allocation5 + $0xc4] sm:$0xff]
    %v111 = vld [vmem:[#allocation5 + $0xcc] sm:$0xff]
    %v112 = vld [vmem:[#allocation5 + $0xd4] sm:$0xf]
    %v113 = vld [vmem:[#allocation5 + $0xd8] sm:$0xff]
    %v114 = vld [vmem:[#allocation5 + $0xe0] sm:$0xff]
    %v115 = vld [vmem:[#allocation5 + $0xe8] sm:$0xff]
    %v116 = vld [vmem:[#allocation5 + $0xf0] sm:$0xff]
    %v117 = vld [vmem:[#allocation5 + $0xf8] sm:$0xf]
    %v118 = vld [vmem:[#allocation5 + $0xfc] sm:$0xff]
    %v119 = vld [vmem:[#allocation5 + $0x104] sm:$0xff]
    %v120 = vld [vmem:[#allocation5 + $0x10c] sm:$0xff]
    %v121 = vld [vmem:[#allocation5 + $0x114] sm:$0xff]
    %v122 = vld [vmem:[#allocation5 + $0x11c] sm:$0xf]
    %v123 = vld [vmem:[#allocation5 + $0x120] sm:$0xff]
    %v124 = vld [vmem:[#allocation5 + $0x128] sm:$0xff]
    %v125 = vld [vmem:[#allocation5 + $0x130] sm:$0xff]
    %v126 = vld [vmem:[#allocation5 + $0x138] sm:$0xff]
    %v127 = vld [vmem:[#allocation5 + $0x140] sm:$0xf]
    %v128 = vld [vmem:[#allocation5 + $0x144] sm:$0xff]
    %v129 = vld [vmem:[#allocation5 + $0x14c] sm:$0xff]
    %v130 = vld [vmem:[#allocation5 + $0x154] sm:$0xff]
    %v131 = vld [vmem:[#allocation5 + $0x15c] sm:$0xff]
    %v132 = vld [vmem:[#allocation5 + $0x164] sm:$0xf]
    %v133 = vld [vmem:[#allocation5 + $0x168] sm:$0xff]
    %v134 = vld [vmem:[#allocation5 + $0x170] sm:$0xff]
    %v135 = vld [vmem:[#allocation5 + $0x178] sm:$0xff]
    %v136 = vld [vmem:[#allocation5 + $0x180] sm:$0xff]
    %v137 = vld [vmem:[#allocation5 + $0x188] sm:$0xf]
    %v138 = vld [vmem:[#allocation5 + $0x18c] sm:$0xff]
    %v139 = vld [vmem:[#allocation5 + $0x194] sm:$0xff]
    %v140 = vld [vmem:[#allocation5 + $0x19c] sm:$0xff]
    %v141 = vld [vmem:[#allocation5 + $0x1a4] sm:$0xff]
    %v142 = vld [vmem:[#allocation5 + $0x1ac] sm:$0xf]
    %v143 = vld [vmem:[#allocation5 + $0x1b0] sm:$0xff]
    %v144 = vld [vmem:[#allocation5 + $0x1b8] sm:$0xff]
    %v145 = vld [vmem:[#allocation5 + $0x1c0] sm:$0xff]
    %v146 = vld [vmem:[#allocation5 + $0x1c8] sm:$0xff]
    %v147 = vld [vmem:[#allocation5 + $0x1d0] sm:$0xf]
    %v148 = vld [vmem:[#allocation5 + $0x1d4] sm:$0xff]
    %v149 = vld [vmem:[#allocation5 + $0x1dc] sm:$0xff]
    %v150 = vld [vmem:[#allocation5 + $0x1e4] sm:$0xff]
    %v151 = vld [vmem:[#allocation5 + $0x1ec] sm:$0xff]
    %v152 = vld [vmem:[#allocation5 + $0x1f4] sm:$0xf]
    %v153 = vld [vmem:[#allocation5 + $0x1f8] sm:$0xff]
    %v154 = vld [vmem:[#allocation5 + $0x200] sm:$0xff]
    %v155 = vld [vmem:[#allocation5 + $0x208] sm:$0xff]
    %v156 = vld [vmem:[#allocation5 + $0x210] sm:$0xff]
    %v157 = vld [vmem:[#allocation5 + $0x218] sm:$0xf]
    %v158 = vld [vmem:[#allocation5 + $0x21c] sm:$0xff]
    %v159 = vld [vmem:[#allocation5 + $0x224] sm:$0xff]
    %v160 = vld [vmem:[#allocation5 + $0x22c] sm:$0xff]
    %v161 = vld [vmem:[#allocation5 + $0x234] sm:$0xff]
    %v162 = vld [vmem:[#allocation5 + $0x23c] sm:$0xf]
    %v163 = vld [vmem:[#allocation5 + $0x240] sm:$0xff]
    %v164 = vld [vmem:[#allocation5 + $0x248] sm:$0xff]
    %v165 = vld [vmem:[#allocation5 + $0x250] sm:$0xff]
    %v166 = vld [vmem:[#allocation5 + $0x258] sm:$0xff]
    %v167 = vld [vmem:[#allocation5 + $0x260] sm:$0xf]
    %v168 = vld [vmem:[#allocation5 + $0x264] sm:$0xff]
    %v169 = vld [vmem:[#allocation5 + $0x26c] sm:$0xff]
    %v170 = vld [vmem:[#allocation5 + $0x274] sm:$0xff]
    %v171 = vld [vmem:[#allocation5 + $0x27c] sm:$0xff]
    %v172 = vld [vmem:[#allocation5 + $0x284] sm:$0xf]
    %v173 = vld [vmem:[#allocation5 + $0x288] sm:$0xff]
    %v174 = vld [vmem:[#allocation5 + $0x290] sm:$0xff]
    %v175 = vld [vmem:[#allocation5 + $0x298] sm:$0xff]
    %v176 = vld [vmem:[#allocation5 + $0x2a0] sm:$0xff]
    %v177 = vld [vmem:[#allocation5 + $0x2a8] sm:$0xf]
    %v178 = vld [vmem:[#allocation5 + $0x2ac] sm:$0xff]
    %v179 = vld [vmem:[#allocation5 + $0x2b4] sm:$0xff]
    %v180 = vld [vmem:[#allocation5 + $0x2bc] sm:$0xff]
    %v181 = vld [vmem:[#allocation5 + $0x2c4] sm:$0xff]
    %v182 = vld [vmem:[#allocation5 + $0x2cc] sm:$0xf]
    %v183 = vld [vmem:[#allocation5 + $0x2d0] sm:$0xff]
    %v184 = vld [vmem:[#allocation5 + $0x2d8] sm:$0xff]
    %v185 = vld [vmem:[#allocation5 + $0x2e0] sm:$0xff]
    %v186 = vld [vmem:[#allocation5 + $0x2e8] sm:$0xff]
    %v187 = vld [vmem:[#allocation5 + $0x2f0] sm:$0xf]
    %v188 = vld [vmem:[#allocation5 + $0x2f4] sm:$0xff]
    %v189 = vld [vmem:[#allocation5 + $0x2fc] sm:$0xff]
    %v190 = vld [vmem:[#allocation5 + $0x304] sm:$0xff]
    %v191 = vld [vmem:[#allocation5 + $0x30c] sm:$0xff]
    %v192 = vld [vmem:[#allocation5 + $0x314] sm:$0xf]
    %v193 = vld [vmem:[#allocation5 + $0x318] sm:$0xff]
    %v194 = vld [vmem:[#allocation5 + $0x320] sm:$0xff]
    %v195 = vld [vmem:[#allocation5 + $0x328] sm:$0xff]
    %v196 = vld [vmem:[#allocation5 + $0x330] sm:$0xff]
    %v197 = vld [vmem:[#allocation5 + $0x338] sm:$0xf]
    %v198 = vld [vmem:[#allocation5 + $0x33c] sm:$0xff]
    %v199 = vld [vmem:[#allocation5 + $0x344] sm:$0xff]
    %v200 = vld [vmem:[#allocation5 + $0x34c] sm:$0xff]
    %v201 = vld [vmem:[#allocation5 + $0x354] sm:$0xff]
    %v202 = vld [vmem:[#allocation5 + $0x35c] sm:$0xf]
    %v203 = vld [vmem:[#allocation5 + $0x360] sm:$0xff]
    %v204 = vld [vmem:[#allocation5 + $0x368] sm:$0xff]
    %v205 = vld [vmem:[#allocation5 + $0x370] sm:$0xff]
    %v206 = vld [vmem:[#allocation5 + $0x378] sm:$0xff]
    %v207 = vld [vmem:[#allocation5 + $0x380] sm:$0xf]
    %v208 = vld [vmem:[#allocation5 + $0x384] sm:$0xff]
    %v209 = vld [vmem:[#allocation5 + $0x38c] sm:$0xff]
    %v210 = vld [vmem:[#allocation5 + $0x394] sm:$0xff]
    %v211 = vld [vmem:[#allocation5 + $0x39c] sm:$0xff]
    %v212 = vld [vmem:[#allocation5 + $0x3a4] sm:$0xf]
    %v213 = vld [vmem:[#allocation5 + $0x3a8] sm:$0xff]
    %v214 = vld [vmem:[#allocation5 + $0x3b0] sm:$0xff]
    %v215 = vld [vmem:[#allocation5 + $0x3b8] sm:$0xff]
    %v216 = vld [vmem:[#allocation5 + $0x3c0] sm:$0xff]
    %v217 = vld [vmem:[#allocation5 + $0x3c8] sm:$0xf]
    %v218 = vld [vmem:[#allocation5 + $0x3cc] sm:$0xff]
    %v219 = vld [vmem:[#allocation5 + $0x3d4] sm:$0xff]
    %v220 = vld [vmem:[#allocation5 + $0x3dc] sm:$0xff]
    %v221 = vld [vmem:[#allocation5 + $0x3e4] sm:$0xff]
    %v222 = vld [vmem:[#allocation5 + $0x3ec] sm:$0xf]
    %v223 = vld [vmem:[#allocation5 + $0x3f0] sm:$0xff]
    %v224 = vld [vmem:[#allocation5 + $0x3f8] sm:$0xff]
    %v225 = vld [vmem:[#allocation5 + $0x400] sm:$0xff]
    %v226 = vld [vmem:[#allocation5 + $0x408] sm:$0xff]
    %v227 = vld [vmem:[#allocation5 + $0x410] sm:$0xf]
    %v228 = vld [vmem:[#allocation5 + $0x414] sm:$0xff]
    %v229 = vld [vmem:[#allocation5 + $0x41c] sm:$0xff]
    %v230 = vld [vmem:[#allocation5 + $0x424] sm:$0xff]
    %v231 = vld [vmem:[#allocation5 + $0x42c] sm:$0xff]
    %v232 = vld [vmem:[#allocation5 + $0x434] sm:$0xf]
    %v233 = vld [vmem:[#allocation5 + $0x438] sm:$0xff]
    %v234 = vld [vmem:[#allocation5 + $0x440] sm:$0xff]
    %v235 = vld [vmem:[#allocation5 + $0x448] sm:$0xff]
    %v236 = vld [vmem:[#allocation5 + $0x450] sm:$0xff]
    %v237 = vld [vmem:[#allocation5 + $0x458] sm:$0xf]
    %v238 = vld [vmem:[#allocation5 + $0x45c] sm:$0xff]
    %v239 = vld [vmem:[#allocation5 + $0x464] sm:$0xff]
    %v240 = vld [vmem:[#allocation5 + $0x46c] sm:$0xff]
    %v241 = vld [vmem:[#allocation5 + $0x474] sm:$0xff]
    %v242 = vld [vmem:[#allocation5 + $0x47c] sm:$0xf]
    %v243 = vld [vmem:[#allocation5 + $0x480] sm:$0xff]
    %v244 = vld [vmem:[#allocation5 + $0x488] sm:$0xff]
    %v245 = vld [vmem:[#allocation5 + $0x490] sm:$0xff]
    %v246 = vld [vmem:[#allocation5 + $0x498] sm:$0xff]
    %v247 = vld [vmem:[#allocation5 + $0x4a0] sm:$0xf]
    %v248 = vld [vmem:[#allocation5 + $0x4a4] sm:$0xff]
    %v249 = vld [vmem:[#allocation5 + $0x4ac] sm:$0xff]
    %v250 = vld [vmem:[#allocation5 + $0x4b4] sm:$0xff]
    %v251 = vld [vmem:[#allocation5 + $0x4bc] sm:$0xff]
    %v252 = vld [vmem:[#allocation5 + $0x4c4] sm:$0xf]
    %v253 = vld [vmem:[#allocation5 + $0x4c8] sm:$0xff]
    %v254 = vld [vmem:[#allocation5 + $0x4d0] sm:$0xff]
    %v255 = vld [vmem:[#allocation5 + $0x4d8] sm:$0xff]
    %v256 = vld [vmem:[#allocation5 + $0x4e0] sm:$0xff]
    %v257 = vld [vmem:[#allocation5 + $0x4e8] sm:$0xf]
    %v258 = vld [vmem:[#allocation5 + $0x4ec] sm:$0xff]
    %v259 = vld [vmem:[#allocation5 + $0x4f4] sm:$0xff]
    %v260 = vld [vmem:[#allocation5 + $0x4fc] sm:$0xff]
    %v261 = vld [vmem:[#allocation5 + $0x504] sm:$0xff]
    %v262 = vld [vmem:[#allocation5 + $0x50c] sm:$0xf]
    %v263 = vld [vmem:[#allocation5 + $0x510] sm:$0xff]
    %v264 = vld [vmem:[#allocation5 + $0x518] sm:$0xff]
    %v265 = vld [vmem:[#allocation5 + $0x520] sm:$0xff]
    %v266 = vld [vmem:[#allocation5 + $0x528] sm:$0xff]
    %v267 = vld [vmem:[#allocation5 + $0x530] sm:$0xf]
    %v268 = vld [vmem:[#allocation5 + $0x534] sm:$0xff]
    %v269 = vld [vmem:[#allocation5 + $0x53c] sm:$0xff]
    %v270 = vld [vmem:[#allocation5 + $0x544] sm:$0xff]
    %v271 = vld [vmem:[#allocation5 + $0x54c] sm:$0xff]
    %v272 = vld [vmem:[#allocation5 + $0x554] sm:$0xf]
    %v273 = vld [vmem:[#allocation5 + $0x558] sm:$0xff]
    %v274 = vld [vmem:[#allocation5 + $0x560] sm:$0xff]
    %v275 = vld [vmem:[#allocation5 + $0x568] sm:$0xff]
    %v276 = vld [vmem:[#allocation5 + $0x570] sm:$0xff]
    %v277 = vld [vmem:[#allocation5 + $0x578] sm:$0xf]
    %v278 = vld [vmem:[#allocation5 + $0x57c] sm:$0xff]
    %v279 = vld [vmem:[#allocation5 + $0x584] sm:$0xff]
    %v280 = vld [vmem:[#allocation5 + $0x58c] sm:$0xff]
    %v281 = vld [vmem:[#allocation5 + $0x594] sm:$0xff]
    %v282 = vld [vmem:[#allocation5 + $0x59c] sm:$0xf]
    %v283 = vld [vmem:[#allocation5 + $0x5a0] sm:$0xff]
    %v284 = vld [vmem:[#allocation5 + $0x5a8] sm:$0xff]
    %v285 = vld [vmem:[#allocation5 + $0x5b0] sm:$0xff]
    %v286 = vld [vmem:[#allocation5 + $0x5b8] sm:$0xff]
    %v287 = vld [vmem:[#allocation5 + $0x5c0] sm:$0xf]
    %v288 = vld [vmem:[#allocation5 + $0x5c4] sm:$0xff]
    %v289 = vld [vmem:[#allocation5 + $0x5cc] sm:$0xff]
    %v290 = vld [vmem:[#allocation5 + $0x5d4] sm:$0xff]
    %v291 = vld [vmem:[#allocation5 + $0x5dc] sm:$0xff]
    %v292 = vld [vmem:[#allocation5 + $0x5e4] sm:$0xf]
    %v293 = vld [vmem:[#allocation5 + $0x5e8] sm:$0xff]
    %v294 = vld [vmem:[#allocation5 + $0x5f0] sm:$0xff]
    %v295 = vld [vmem:[#allocation5 + $0x5f8] sm:$0xff]
    %v296 = vld [vmem:[#allocation5 + $0x600] sm:$0xff]
    %v297 = vld [vmem:[#allocation5 + $0x608] sm:$0xf]
    %v298 = vld [vmem:[#allocation5 + $0x60c] sm:$0xff]
    %v299 = vld [vmem:[#allocation5 + $0x614] sm:$0xff]
    %v300 = vld [vmem:[#allocation5 + $0x61c] sm:$0xff]
    %v301 = vld [vmem:[#allocation5 + $0x624] sm:$0xff]
    %v302 = vld [vmem:[#allocation5 + $0x62c] sm:$0xf]
    %v303 = vld [vmem:[#allocation5 + $0x630] sm:$0xff]
    %v304 = vld [vmem:[#allocation5 + $0x638] sm:$0xff]
    %v305 = vld [vmem:[#allocation5 + $0x640] sm:$0xff]
    %v306 = vld [vmem:[#allocation5 + $0x648] sm:$0xff]
    %v307 = vld [vmem:[#allocation5 + $0x650] sm:$0xf]
    %v308 = vld [vmem:[#allocation5 + $0x654] sm:$0xff]
    %v309 = vld [vmem:[#allocation5 + $0x65c] sm:$0xff]
    %v310 = vld [vmem:[#allocation5 + $0x664] sm:$0xff]
    %v311 = vld [vmem:[#allocation5 + $0x66c] sm:$0xff]
    %v312 = vld [vmem:[#allocation5 + $0x674] sm:$0xf]
    %v313 = vld [vmem:[#allocation5 + $0x678] sm:$0xff]
    %v314 = vld [vmem:[#allocation5 + $0x680] sm:$0xff]
    %v315 = vld [vmem:[#allocation5 + $0x688] sm:$0xff]
    %v316 = vld [vmem:[#allocation5 + $0x690] sm:$0xff]
    %v317 = vld [vmem:[#allocation5 + $0x698] sm:$0xf]
    %v318 = vld [vmem:[#allocation5 + $0x69c] sm:$0xff]
    %v319 = vld [vmem:[#allocation5 + $0x6a4] sm:$0xff]
    %v320 = vld [vmem:[#allocation5 + $0x6ac] sm:$0xff]
    %v321 = vld [vmem:[#allocation5 + $0x6b4] sm:$0xff]
    %v322 = vld [vmem:[#allocation5 + $0x6bc] sm:$0xf]
    %v327 = vunpack.c.l.b16 %v79
    %v328 = vunpack.c.h.b16 %v79
    %v329 = vunpack.c.l.b16 %v80
    %v330 = vunpack.c.l.b16 %v81
    %v331 = vunpack.c.h.b16 %v81
    %v332 = vunpack.c.l.b16 %v82
    %v333 = vpack.c.b16 %v330, %v327
    %v334 = vpack.c.b16 %v331, %v328
    %v335 = vpack.c.b16 %v332, %v329
    %v579 = vunpack.c.l.b16 %v83
    %v580 = vunpack.c.h.b16 %v83
    %v581 = vunpack.c.l.b16 %v84
    %v582 = vunpack.c.h.b16 %v84
    %v583 = vunpack.c.l.b16 %v85
    %v584 = vunpack.c.h.b16 %v85
    %v585 = vunpack.c.l.b16 %v86
    %v586 = vunpack.c.h.b16 %v86
    %v587 = vunpack.c.l.b16 %v87
    %v588 = vunpack.c.l.b16 %v88
    %v589 = vunpack.c.h.b16 %v88
    %v590 = vunpack.c.l.b16 %v89
    %v591 = vunpack.c.h.b16 %v89
    %v592 = vunpack.c.l.b16 %v90
    %v593 = vunpack.c.h.b16 %v90
    %v594 = vunpack.c.l.b16 %v91
    %v595 = vunpack.c.h.b16 %v91
    %v596 = vunpack.c.l.b16 %v92
    %v597 = vunpack.c.l.b16 %v93
    %v598 = vunpack.c.h.b16 %v93
    %v599 = vunpack.c.l.b16 %v94
    %v600 = vunpack.c.h.b16 %v94
    %v601 = vunpack.c.l.b16 %v95
    %v602 = vunpack.c.h.b16 %v95
    %v603 = vunpack.c.l.b16 %v96
    %v604 = vunpack.c.h.b16 %v96
    %v605 = vunpack.c.l.b16 %v97
    %v606 = vunpack.c.l.b16 %v98
    %v607 = vunpack.c.h.b16 %v98
    %v608 = vunpack.c.l.b16 %v99
    %v609 = vunpack.c.h.b16 %v99
    %v610 = vunpack.c.l.b16 %v100
    %v611 = vunpack.c.h.b16 %v100
    %v612 = vunpack.c.l.b16 %v101
    %v613 = vunpack.c.h.b16 %v101
    %v614 = vunpack.c.l.b16 %v102
    %v615 = vunpack.c.l.b16 %v103
    %v616 = vunpack.c.h.b16 %v103
    %v617 = vunpack.c.l.b16 %v104
    %v618 = vunpack.c.h.b16 %v104
    %v619 = vunpack.c.l.b16 %v105
    %v620 = vunpack.c.h.b16 %v105
    %v621 = vunpack.c.l.b16 %v106
    %v622 = vunpack.c.h.b16 %v106
    %v623 = vunpack.c.l.b16 %v107
    %v624 = vunpack.c.l.b16 %v108
    %v625 = vunpack.c.h.b16 %v108
    %v626 = vunpack.c.l.b16 %v109
    %v627 = vunpack.c.h.b16 %v109
    %v628 = vunpack.c.l.b16 %v110
    %v629 = vunpack.c.h.b16 %v110
    %v630 = vunpack.c.l.b16 %v111
    %v631 = vunpack.c.h.b16 %v111
    %v632 = vunpack.c.l.b16 %v112
    %v633 = vunpack.c.l.b16 %v113
    %v634 = vunpack.c.h.b16 %v113
    %v635 = vunpack.c.l.b16 %v114
    %v636 = vunpack.c.h.b16 %v114
    %v637 = vunpack.c.l.b16 %v115
    %v638 = vunpack.c.h.b16 %v115
    %v639 = vunpack.c.l.b16 %v116
    %v640 = vunpack.c.h.b16 %v116
    %v641 = vunpack.c.l.b16 %v117
    %v642 = vunpack.c.l.b16 %v118
    %v643 = vunpack.c.h.b16 %v118
    %v644 = vunpack.c.l.b16 %v119
    %v645 = vunpack.c.h.b16 %v119
    %v646 = vunpack.c.l.b16 %v120
    %v647 = vunpack.c.h.b16 %v120
    %v648 = vunpack.c.l.b16 %v121
    %v649 = vunpack.c.h.b16 %v121
    %v650 = vunpack.c.l.b16 %v122
    %v651 = vunpack.c.l.b16 %v123
    %v652 = vunpack.c.h.b16 %v123
    %v653 = vunpack.c.l.b16 %v124
    %v654 = vunpack.c.h.b16 %v124
    %v655 = vunpack.c.l.b16 %v125
    %v656 = vunpack.c.h.b16 %v125
    %v657 = vunpack.c.l.b16 %v126
    %v658 = vunpack.c.h.b16 %v126
    %v659 = vunpack.c.l.b16 %v127
    %v660 = vunpack.c.l.b16 %v128
    %v661 = vunpack.c.h.b16 %v128
    %v662 = vunpack.c.l.b16 %v129
    %v663 = vunpack.c.h.b16 %v129
    %v664 = vunpack.c.l.b16 %v130
    %v665 = vunpack.c.h.b16 %v130
    %v666 = vunpack.c.l.b16 %v131
    %v667 = vunpack.c.h.b16 %v131
    %v668 = vunpack.c.l.b16 %v132
    %v669 = vunpack.c.l.b16 %v133
    %v670 = vunpack.c.h.b16 %v133
    %v671 = vunpack.c.l.b16 %v134
    %v672 = vunpack.c.h.b16 %v134
    %v673 = vunpack.c.l.b16 %v135
    %v674 = vunpack.c.h.b16 %v135
    %v675 = vunpack.c.l.b16 %v136
    %v676 = vunpack.c.h.b16 %v136
    %v677 = vunpack.c.l.b16 %v137
    %v678 = vunpack.c.l.b16 %v138
    %v679 = vunpack.c.h.b16 %v138
    %v680 = vunpack.c.l.b16 %v139
    %v681 = vunpack.c.h.b16 %v139
    %v682 = vunpack.c.l.b16 %v140
    %v683 = vunpack.c.h.b16 %v140
    %v684 = vunpack.c.l.b16 %v141
    %v685 = vunpack.c.h.b16 %v141
    %v686 = vunpack.c.l.b16 %v142
    %v687 = vunpack.c.l.b16 %v143
    %v688 = vunpack.c.h.b16 %v143
    %v689 = vunpack.c.l.b16 %v144
    %v690 = vunpack.c.h.b16 %v144
    %v691 = vunpack.c.l.b16 %v145
    %v692 = vunpack.c.h.b16 %v145
    %v693 = vunpack.c.l.b16 %v146
    %v694 = vunpack.c.h.b16 %v146
    %v695 = vunpack.c.l.b16 %v147
    %v696 = vunpack.c.l.b16 %v148
    %v697 = vunpack.c.h.b16 %v148
    %v698 = vunpack.c.l.b16 %v149
    %v699 = vunpack.c.h.b16 %v149
    %v700 = vunpack.c.l.b16 %v150
    %v701 = vunpack.c.h.b16 %v150
    %v702 = vunpack.c.l.b16 %v151
    %v703 = vunpack.c.h.b16 %v151
    %v704 = vunpack.c.l.b16 %v152
    %v705 = vunpack.c.l.b16 %v153
    %v706 = vunpack.c.h.b16 %v153
    %v707 = vunpack.c.l.b16 %v154
    %v708 = vunpack.c.h.b16 %v154
    %v709 = vunpack.c.l.b16 %v155
    %v710 = vunpack.c.h.b16 %v155
    %v711 = vunpack.c.l.b16 %v156
    %v712 = vunpack.c.h.b16 %v156
    %v713 = vunpack.c.l.b16 %v157
    %v714 = vunpack.c.l.b16 %v158
    %v715 = vunpack.c.h.b16 %v158
    %v716 = vunpack.c.l.b16 %v159
    %v717 = vunpack.c.h.b16 %v159
    %v718 = vunpack.c.l.b16 %v160
    %v719 = vunpack.c.h.b16 %v160
    %v720 = vunpack.c.l.b16 %v161
    %v721 = vunpack.c.h.b16 %v161
    %v722 = vunpack.c.l.b16 %v162
    %v723 = vunpack.c.l.b16 %v163
    %v724 = vunpack.c.h.b16 %v163
    %v725 = vunpack.c.l.b16 %v164
    %v726 = vunpack.c.h.b16 %v164
    %v727 = vunpack.c.l.b16 %v165
    %v728 = vunpack.c.h.b16 %v165
    %v729 = vunpack.c.l.b16 %v166
    %v730 = vunpack.c.h.b16 %v166
    %v731 = vunpack.c.l.b16 %v167
    %v732 = vunpack.c.l.b16 %v168
    %v733 = vunpack.c.h.b16 %v168
    %v734 = vunpack.c.l.b16 %v169
    %v735 = vunpack.c.h.b16 %v169
    %v736 = vunpack.c.l.b16 %v170
    %v737 = vunpack.c.h.b16 %v170
    %v738 = vunpack.c.l.b16 %v171
    %v739 = vunpack.c.h.b16 %v171
    %v740 = vunpack.c.l.b16 %v172
    %v741 = vunpack.c.l.b16 %v173
    %v742 = vunpack.c.h.b16 %v173
    %v743 = vunpack.c.l.b16 %v174
    %v744 = vunpack.c.h.b16 %v174
    %v745 = vunpack.c.l.b16 %v175
    %v746 = vunpack.c.h.b16 %v175
    %v747 = vunpack.c.l.b16 %v176
    %v748 = vunpack.c.h.b16 %v176
    %v749 = vunpack.c.l.b16 %v177
    %v750 = vunpack.c.l.b16 %v178
    %v751 = vunpack.c.h.b16 %v178
    %v752 = vunpack.c.l.b16 %v179
    %v753 = vunpack.c.h.b16 %v179
    %v754 = vunpack.c.l.b16 %v180
    %v755 = vunpack.c.h.b16 %v180
    %v756 = vunpack.c.l.b16 %v181
    %v757 = vunpack.c.h.b16 %v181
    %v758 = vunpack.c.l.b16 %v182
    %v759 = vunpack.c.l.b16 %v183
    %v760 = vunpack.c.h.b16 %v183
    %v761 = vunpack.c.l.b16 %v184
    %v762 = vunpack.c.h.b16 %v184
    %v763 = vunpack.c.l.b16 %v185
    %v764 = vunpack.c.h.b16 %v185
    %v765 = vunpack.c.l.b16 %v186
    %v766 = vunpack.c.h.b16 %v186
    %v767 = vunpack.c.l.b16 %v187
    %v768 = vunpack.c.l.b16 %v188
    %v769 = vunpack.c.h.b16 %v188
    %v770 = vunpack.c.l.b16 %v189
    %v771 = vunpack.c.h.b16 %v189
    %v772 = vunpack.c.l.b16 %v190
    %v773 = vunpack.c.h.b16 %v190
    %v774 = vunpack.c.l.b16 %v191
    %v775 = vunpack.c.h.b16 %v191
    %v776 = vunpack.c.l.b16 %v192
    %v777 = vunpack.c.l.b16 %v193
    %v778 = vunpack.c.h.b16 %v193
    %v779 = vunpack.c.l.b16 %v194
    %v780 = vunpack.c.h.b16 %v194
    %v781 = vunpack.c.l.b16 %v195
    %v782 = vunpack.c.h.b16 %v195
    %v783 = vunpack.c.l.b16 %v196
    %v784 = vunpack.c.h.b16 %v196
    %v785 = vunpack.c.l.b16 %v197
    %v786 = vunpack.c.l.b16 %v198
    %v787 = vunpack.c.h.b16 %v198
    %v788 = vunpack.c.l.b16 %v199
    %v789 = vunpack.c.h.b16 %v199
    %v790 = vunpack.c.l.b16 %v200
    %v791 = vunpack.c.h.b16 %v200
    %v792 = vunpack.c.l.b16 %v201
    %v793 = vunpack.c.h.b16 %v201
    %v794 = vunpack.c.l.b16 %v202
    %v795 = vunpack.c.l.b16 %v203
    %v796 = vunpack.c.h.b16 %v203
    %v797 = vunpack.c.l.b16 %v204
    %v798 = vunpack.c.h.b16 %v204
    %v799 = vunpack.c.l.b16 %v205
    %v800 = vunpack.c.h.b16 %v205
    %v801 = vunpack.c.l.b16 %v206
    %v802 = vunpack.c.h.b16 %v206
    %v803 = vunpack.c.l.b16 %v207
    %v804 = vunpack.c.l.b16 %v208
    %v805 = vunpack.c.h.b16 %v208
    %v806 = vunpack.c.l.b16 %v209
    %v807 = vunpack.c.h.b16 %v209
    %v808 = vunpack.c.l.b16 %v210
    %v809 = vunpack.c.h.b16 %v210
    %v810 = vunpack.c.l.b16 %v211
    %v811 = vunpack.c.h.b16 %v211
    %v812 = vunpack.c.l.b16 %v212
    %v813 = vunpack.c.l.b16 %v213
    %v814 = vunpack.c.h.b16 %v213
    %v815 = vunpack.c.l.b16 %v214
    %v816 = vunpack.c.h.b16 %v214
    %v817 = vunpack.c.l.b16 %v215
    %v818 = vunpack.c.h.b16 %v215
    %v819 = vunpack.c.l.b16 %v216
    %v820 = vunpack.c.h.b16 %v216
    %v821 = vunpack.c.l.b16 %v217
    %v822 = vunpack.c.l.b16 %v218
    %v823 = vunpack.c.h.b16 %v218
    %v824 = vunpack.c.l.b16 %v219
    %v825 = vunpack.c.h.b16 %v219
    %v826 = vunpack.c.l.b16 %v220
    %v827 = vunpack.c.h.b16 %v220
    %v828 = vunpack.c.l.b16 %v221
    %v829 = vunpack.c.h.b16 %v221
    %v830 = vunpack.c.l.b16 %v222
    %v831 = vunpack.c.l.b16 %v223
    %v832 = vunpack.c.h.b16 %v223
    %v833 = vunpack.c.l.b16 %v224
    %v834 = vunpack.c.h.b16 %v224
    %v835 = vunpack.c.l.b16 %v225
    %v836 = vunpack.c.h.b16 %v225
    %v837 = vunpack.c.l.b16 %v226
    %v838 = vunpack.c.h.b16 %v226
    %v839 = vunpack.c.l.b16 %v227
    %v840 = vunpack.c.l.b16 %v228
    %v841 = vunpack.c.h.b16 %v228
    %v842 = vunpack.c.l.b16 %v229
    %v843 = vunpack.c.h.b16 %v229
    %v844 = vunpack.c.l.b16 %v230
    %v845 = vunpack.c.h.b16 %v230
    %v846 = vunpack.c.l.b16 %v231
    %v847 = vunpack.c.h.b16 %v231
    %v848 = vunpack.c.l.b16 %v232
    %v849 = vunpack.c.l.b16 %v233
    %v850 = vunpack.c.h.b16 %v233
    %v851 = vunpack.c.l.b16 %v234
    %v852 = vunpack.c.h.b16 %v234
    %v853 = vunpack.c.l.b16 %v235
    %v854 = vunpack.c.h.b16 %v235
    %v855 = vunpack.c.l.b16 %v236
    %v856 = vunpack.c.h.b16 %v236
    %v857 = vunpack.c.l.b16 %v237
    %v858 = vunpack.c.l.b16 %v238
    %v859 = vunpack.c.h.b16 %v238
    %v860 = vunpack.c.l.b16 %v239
    %v861 = vunpack.c.h.b16 %v239
    %v862 = vunpack.c.l.b16 %v240
    %v863 = vunpack.c.h.b16 %v240
    %v864 = vunpack.c.l.b16 %v241
    %v865 = vunpack.c.h.b16 %v241
    %v866 = vunpack.c.l.b16 %v242
    %v867 = vunpack.c.l.b16 %v243
    %v868 = vunpack.c.h.b16 %v243
    %v869 = vunpack.c.l.b16 %v244
    %v870 = vunpack.c.h.b16 %v244
    %v871 = vunpack.c.l.b16 %v245
    %v872 = vunpack.c.h.b16 %v245
    %v873 = vunpack.c.l.b16 %v246
    %v874 = vunpack.c.h.b16 %v246
    %v875 = vunpack.c.l.b16 %v247
    %v876 = vunpack.c.l.b16 %v248
    %v877 = vunpack.c.h.b16 %v248
    %v878 = vunpack.c.l.b16 %v249
    %v879 = vunpack.c.h.b16 %v249
    %v880 = vunpack.c.l.b16 %v250
    %v881 = vunpack.c.h.b16 %v250
    %v882 = vunpack.c.l.b16 %v251
    %v883 = vunpack.c.h.b16 %v251
    %v884 = vunpack.c.l.b16 %v252
    %v885 = vunpack.c.l.b16 %v253
    %v886 = vunpack.c.h.b16 %v253
    %v887 = vunpack.c.l.b16 %v254
    %v888 = vunpack.c.h.b16 %v254
    %v889 = vunpack.c.l.b16 %v255
    %v890 = vunpack.c.h.b16 %v255
    %v891 = vunpack.c.l.b16 %v256
    %v892 = vunpack.c.h.b16 %v256
    %v893 = vunpack.c.l.b16 %v257
    %v894 = vunpack.c.l.b16 %v258
    %v895 = vunpack.c.h.b16 %v258
    %v896 = vunpack.c.l.b16 %v259
    %v897 = vunpack.c.h.b16 %v259
    %v898 = vunpack.c.l.b16 %v260
    %v899 = vunpack.c.h.b16 %v260
    %v900 = vunpack.c.l.b16 %v261
    %v901 = vunpack.c.h.b16 %v261
    %v902 = vunpack.c.l.b16 %v262
    %v903 = vunpack.c.l.b16 %v263
    %v904 = vunpack.c.h.b16 %v263
    %v905 = vunpack.c.l.b16 %v264
    %v906 = vunpack.c.h.b16 %v264
    %v907 = vunpack.c.l.b16 %v265
    %v908 = vunpack.c.h.b16 %v265
    %v909 = vunpack.c.l.b16 %v266
    %v910 = vunpack.c.h.b16 %v266
    %v911 = vunpack.c.l.b16 %v267
    %v912 = vunpack.c.l.b16 %v268
    %v913 = vunpack.c.h.b16 %v268
    %v914 = vunpack.c.l.b16 %v269
    %v915 = vunpack.c.h.b16 %v269
    %v916 = vunpack.c.l.b16 %v270
    %v917 = vunpack.c.h.b16 %v270
    %v918 = vunpack.c.l.b16 %v271
    %v919 = vunpack.c.h.b16 %v271
    %v920 = vunpack.c.l.b16 %v272
    %v921 = vunpack.c.l.b16 %v273
    %v922 = vunpack.c.h.b16 %v273
    %v923 = vunpack.c.l.b16 %v274
    %v924 = vunpack.c.h.b16 %v274
    %v925 = vunpack.c.l.b16 %v275
    %v926 = vunpack.c.h.b16 %v275
    %v927 = vunpack.c.l.b16 %v276
    %v928 = vunpack.c.h.b16 %v276
    %v929 = vunpack.c.l.b16 %v277
    %v930 = vunpack.c.l.b16 %v278
    %v931 = vunpack.c.h.b16 %v278
    %v932 = vunpack.c.l.b16 %v279
    %v933 = vunpack.c.h.b16 %v279
    %v934 = vunpack.c.l.b16 %v280
    %v935 = vunpack.c.h.b16 %v280
    %v936 = vunpack.c.l.b16 %v281
    %v937 = vunpack.c.h.b16 %v281
    %v938 = vunpack.c.l.b16 %v282
    %v939 = vunpack.c.l.b16 %v283
    %v940 = vunpack.c.h.b16 %v283
    %v941 = vunpack.c.l.b16 %v284
    %v942 = vunpack.c.h.b16 %v284
    %v943 = vunpack.c.l.b16 %v285
    %v944 = vunpack.c.h.b16 %v285
    %v945 = vunpack.c.l.b16 %v286
    %v946 = vunpack.c.h.b16 %v286
    %v947 = vunpack.c.l.b16 %v287
    %v948 = vunpack.c.l.b16 %v288
    %v949 = vunpack.c.h.b16 %v288
    %v950 = vunpack.c.l.b16 %v289
    %v951 = vunpack.c.h.b16 %v289
    %v952 = vunpack.c.l.b16 %v290
    %v953 = vunpack.c.h.b16 %v290
    %v954 = vunpack.c.l.b16 %v291
    %v955 = vunpack.c.h.b16 %v291
    %v956 = vunpack.c.l.b16 %v292
    %v957 = vunpack.c.l.b16 %v293
    %v958 = vunpack.c.h.b16 %v293
    %v959 = vunpack.c.l.b16 %v294
    %v960 = vunpack.c.h.b16 %v294
    %v961 = vunpack.c.l.b16 %v295
    %v962 = vunpack.c.h.b16 %v295
    %v963 = vunpack.c.l.b16 %v296
    %v964 = vunpack.c.h.b16 %v296
    %v965 = vunpack.c.l.b16 %v297
    %v966 = vunpack.c.l.b16 %v298
    %v967 = vunpack.c.h.b16 %v298
    %v968 = vunpack.c.l.b16 %v299
    %v969 = vunpack.c.h.b16 %v299
    %v970 = vunpack.c.l.b16 %v300
    %v971 = vunpack.c.h.b16 %v300
    %v972 = vunpack.c.l.b16 %v301
    %v973 = vunpack.c.h.b16 %v301
    %v974 = vunpack.c.l.b16 %v302
    %v975 = vunpack.c.l.b16 %v303
    %v976 = vunpack.c.h.b16 %v303
    %v977 = vunpack.c.l.b16 %v304
    %v978 = vunpack.c.h.b16 %v304
    %v979 = vunpack.c.l.b16 %v305
    %v980 = vunpack.c.h.b16 %v305
    %v981 = vunpack.c.l.b16 %v306
    %v982 = vunpack.c.h.b16 %v306
    %v983 = vunpack.c.l.b16 %v307
    %v984 = vunpack.c.l.b16 %v308
    %v985 = vunpack.c.h.b16 %v308
    %v986 = vunpack.c.l.b16 %v309
    %v987 = vunpack.c.h.b16 %v309
    %v988 = vunpack.c.l.b16 %v310
    %v989 = vunpack.c.h.b16 %v310
    %v990 = vunpack.c.l.b16 %v311
    %v991 = vunpack.c.h.b16 %v311
    %v992 = vunpack.c.l.b16 %v312
    %v993 = vunpack.c.l.b16 %v313
    %v994 = vunpack.c.h.b16 %v313
    %v995 = vunpack.c.l.b16 %v314
    %v996 = vunpack.c.h.b16 %v314
    %v997 = vunpack.c.l.b16 %v315
    %v998 = vunpack.c.h.b16 %v315
    %v999 = vunpack.c.l.b16 %v316
    %v1000 = vunpack.c.h.b16 %v316
    %v1001 = vunpack.c.l.b16 %v317
    %v1002 = vunpack.c.l.b16 %v318
    %v1003 = vunpack.c.h.b16 %v318
    %v1004 = vunpack.c.l.b16 %v319
    %v1005 = vunpack.c.h.b16 %v319
    %v1006 = vunpack.c.l.b16 %v320
    %v1007 = vunpack.c.h.b16 %v320
    %v1008 = vunpack.c.l.b16 %v321
    %v1009 = vunpack.c.h.b16 %v321
    %v1010 = vunpack.c.l.b16 %v322
    %v1011 = vpack.c.b16 %v588, %v579
    %v1012 = vpack.c.b16 %v589, %v580
    %v1013 = vpack.c.b16 %v590, %v581
    %v1014 = vpack.c.b16 %v591, %v582
    %v1015 = vpack.c.b16 %v592, %v583
    %v1016 = vpack.c.b16 %v593, %v584
    %v1017 = vpack.c.b16 %v594, %v585
    %v1018 = vpack.c.b16 %v595, %v586
    %v1019 = vpack.c.b16 %v596, %v587
    %v1020 = vpack.c.b16 %v606, %v597
    %v1021 = vpack.c.b16 %v607, %v598
    %v1022 = vpack.c.b16 %v608, %v599
    %v1023 = vpack.c.b16 %v609, %v600
    %v1024 = vpack.c.b16 %v610, %v601
    %v1025 = vpack.c.b16 %v611, %v602
    %v1026 = vpack.c.b16 %v612, %v603
    %v1027 = vpack.c.b16 %v613, %v604
    %v1028 = vpack.c.b16 %v614, %v605
    %v1029 = vpack.c.b16 %v624, %v615
    %v1030 = vpack.c.b16 %v625, %v616
    %v1031 = vpack.c.b16 %v626, %v617
    %v1032 = vpack.c.b16 %v627, %v618
    %v1033 = vpack.c.b16 %v628, %v619
    %v1034 = vpack.c.b16 %v629, %v620
    %v1035 = vpack.c.b16 %v630, %v621
    %v1036 = vpack.c.b16 %v631, %v622
    %v1037 = vpack.c.b16 %v632, %v623
    %v1038 = vpack.c.b16 %v642, %v633
    %v1039 = vpack.c.b16 %v643, %v634
    %v1040 = vpack.c.b16 %v644, %v635
    %v1041 = vpack.c.b16 %v645, %v636
    %v1042 = vpack.c.b16 %v646, %v637
    %v1043 = vpack.c.b16 %v647, %v638
    %v1044 = vpack.c.b16 %v648, %v639
    %v1045 = vpack.c.b16 %v649, %v640
    %v1046 = vpack.c.b16 %v650, %v641
    %v1047 = vpack.c.b16 %v660, %v651
    %v1048 = vpack.c.b16 %v661, %v652
    %v1049 = vpack.c.b16 %v662, %v653
    %v1050 = vpack.c.b16 %v663, %v654
    %v1051 = vpack.c.b16 %v664, %v655
    %v1052 = vpack.c.b16 %v665, %v656
    %v1053 = vpack.c.b16 %v666, %v657
    %v1054 = vpack.c.b16 %v667, %v658
    %v1055 = vpack.c.b16 %v668, %v659
    %v1056 = vpack.c.b16 %v678, %v669
    %v1057 = vpack.c.b16 %v679, %v670
    %v1058 = vpack.c.b16 %v680, %v671
    %v1059 = vpack.c.b16 %v681, %v672
    %v1060 = vpack.c.b16 %v682, %v673
    %v1061 = vpack.c.b16 %v683, %v674
    %v1062 = vpack.c.b16 %v684, %v675
    %v1063 = vpack.c.b16 %v685, %v676
    %v1064 = vpack.c.b16 %v686, %v677
    %v1065 = vpack.c.b16 %v696, %v687
    %v1066 = vpack.c.b16 %v697, %v688
    %v1067 = vpack.c.b16 %v698, %v689
    %v1068 = vpack.c.b16 %v699, %v690
    %v1069 = vpack.c.b16 %v700, %v691
    %v1070 = vpack.c.b16 %v701, %v692
    %v1071 = vpack.c.b16 %v702, %v693
    %v1072 = vpack.c.b16 %v703, %v694
    %v1073 = vpack.c.b16 %v704, %v695
    %v1074 = vpack.c.b16 %v714, %v705
    %v1075 = vpack.c.b16 %v715, %v706
    %v1076 = vpack.c.b16 %v716, %v707
    %v1077 = vpack.c.b16 %v717, %v708
    %v1078 = vpack.c.b16 %v718, %v709
    %v1079 = vpack.c.b16 %v719, %v710
    %v1080 = vpack.c.b16 %v720, %v711
    %v1081 = vpack.c.b16 %v721, %v712
    %v1082 = vpack.c.b16 %v722, %v713
    %v1083 = vpack.c.b16 %v732, %v723
    %v1084 = vpack.c.b16 %v733, %v724
    %v1085 = vpack.c.b16 %v734, %v725
    %v1086 = vpack.c.b16 %v735, %v726
    %v1087 = vpack.c.b16 %v736, %v727
    %v1088 = vpack.c.b16 %v737, %v728
    %v1089 = vpack.c.b16 %v738, %v729
    %v1090 = vpack.c.b16 %v739, %v730
    %v1091 = vpack.c.b16 %v740, %v731
    %v1092 = vpack.c.b16 %v750, %v741
    %v1093 = vpack.c.b16 %v751, %v742
    %v1094 = vpack.c.b16 %v752, %v743
    %v1095 = vpack.c.b16 %v753, %v744
    %v1096 = vpack.c.b16 %v754, %v745
    %v1097 = vpack.c.b16 %v755, %v746
    %v1098 = vpack.c.b16 %v756, %v747
    %v1099 = vpack.c.b16 %v757, %v748
    %v1100 = vpack.c.b16 %v758, %v749
    %v1101 = vpack.c.b16 %v768, %v759
    %v1102 = vpack.c.b16 %v769, %v760
    %v1103 = vpack.c.b16 %v770, %v761
    %v1104 = vpack.c.b16 %v771, %v762
    %v1105 = vpack.c.b16 %v772, %v763
    %v1106 = vpack.c.b16 %v773, %v764
    %v1107 = vpack.c.b16 %v774, %v765
    %v1108 = vpack.c.b16 %v775, %v766
    %v1109 = vpack.c.b16 %v776, %v767
    %v1110 = vpack.c.b16 %v786, %v777
    %v1111 = vpack.c.b16 %v787, %v778
    %v1112 = vpack.c.b16 %v788, %v779
    %v1113 = vpack.c.b16 %v789, %v780
    %v1114 = vpack.c.b16 %v790, %v781
    %v1115 = vpack.c.b16 %v791, %v782
    %v1116 = vpack.c.b16 %v792, %v783
    %v1117 = vpack.c.b16 %v793, %v784
    %v1118 = vpack.c.b16 %v794, %v785
    %v1119 = vpack.c.b16 %v804, %v795
    %v1120 = vpack.c.b16 %v805, %v796
    %v1121 = vpack.c.b16 %v806, %v797
    %v1122 = vpack.c.b16 %v807, %v798
    %v1123 = vpack.c.b16 %v808, %v799
    %v1124 = vpack.c.b16 %v809, %v800
    %v1125 = vpack.c.b16 %v810, %v801
    %v1126 = vpack.c.b16 %v811, %v802
    %v1127 = vpack.c.b16 %v812, %v803
    %v1128 = vpack.c.b16 %v822, %v813
    %v1129 = vpack.c.b16 %v823, %v814
    %v1130 = vpack.c.b16 %v824, %v815
    %v1131 = vpack.c.b16 %v825, %v816
    %v1132 = vpack.c.b16 %v826, %v817
    %v1133 = vpack.c.b16 %v827, %v818
    %v1134 = vpack.c.b16 %v828, %v819
    %v1135 = vpack.c.b16 %v829, %v820
    %v1136 = vpack.c.b16 %v830, %v821
    %v1137 = vpack.c.b16 %v840, %v831
    %v1138 = vpack.c.b16 %v841, %v832
    %v1139 = vpack.c.b16 %v842, %v833
    %v1140 = vpack.c.b16 %v843, %v834
    %v1141 = vpack.c.b16 %v844, %v835
    %v1142 = vpack.c.b16 %v845, %v836
    %v1143 = vpack.c.b16 %v846, %v837
    %v1144 = vpack.c.b16 %v847, %v838
    %v1145 = vpack.c.b16 %v848, %v839
    %v1146 = vpack.c.b16 %v858, %v849
    %v1147 = vpack.c.b16 %v859, %v850
    %v1148 = vpack.c.b16 %v860, %v851
    %v1149 = vpack.c.b16 %v861, %v852
    %v1150 = vpack.c.b16 %v862, %v853
    %v1151 = vpack.c.b16 %v863, %v854
    %v1152 = vpack.c.b16 %v864, %v855
    %v1153 = vpack.c.b16 %v865, %v856
    %v1154 = vpack.c.b16 %v866, %v857
    %v1155 = vpack.c.b16 %v876, %v867
    %v1156 = vpack.c.b16 %v877, %v868
    %v1157 = vpack.c.b16 %v878, %v869
    %v1158 = vpack.c.b16 %v879, %v870
    %v1159 = vpack.c.b16 %v880, %v871
    %v1160 = vpack.c.b16 %v881, %v872
    %v1161 = vpack.c.b16 %v882, %v873
    %v1162 = vpack.c.b16 %v883, %v874
    %v1163 = vpack.c.b16 %v884, %v875
    %v1164 = vpack.c.b16 %v894, %v885
    %v1165 = vpack.c.b16 %v895, %v886
    %v1166 = vpack.c.b16 %v896, %v887
    %v1167 = vpack.c.b16 %v897, %v888
    %v1168 = vpack.c.b16 %v898, %v889
    %v1169 = vpack.c.b16 %v899, %v890
    %v1170 = vpack.c.b16 %v900, %v891
    %v1171 = vpack.c.b16 %v901, %v892
    %v1172 = vpack.c.b16 %v902, %v893
    %v1173 = vpack.c.b16 %v912, %v903
    %v1174 = vpack.c.b16 %v913, %v904
    %v1175 = vpack.c.b16 %v914, %v905
    %v1176 = vpack.c.b16 %v915, %v906
    %v1177 = vpack.c.b16 %v916, %v907
    %v1178 = vpack.c.b16 %v917, %v908
    %v1179 = vpack.c.b16 %v918, %v909
    %v1180 = vpack.c.b16 %v919, %v910
    %v1181 = vpack.c.b16 %v920, %v911
    %v1182 = vpack.c.b16 %v930, %v921
    %v1183 = vpack.c.b16 %v931, %v922
    %v1184 = vpack.c.b16 %v932, %v923
    %v1185 = vpack.c.b16 %v933, %v924
    %v1186 = vpack.c.b16 %v934, %v925
    %v1187 = vpack.c.b16 %v935, %v926
    %v1188 = vpack.c.b16 %v936, %v927
    %v1189 = vpack.c.b16 %v937, %v928
    %v1190 = vpack.c.b16 %v938, %v929
    %v1191 = vpack.c.b16 %v948, %v939
    %v1192 = vpack.c.b16 %v949, %v940
    %v1193 = vpack.c.b16 %v950, %v941
    %v1194 = vpack.c.b16 %v951, %v942
    %v1195 = vpack.c.b16 %v952, %v943
    %v1196 = vpack.c.b16 %v953, %v944
    %v1197 = vpack.c.b16 %v954, %v945
    %v1198 = vpack.c.b16 %v955, %v946
    %v1199 = vpack.c.b16 %v956, %v947
    %v1200 = vpack.c.b16 %v966, %v957
    %v1201 = vpack.c.b16 %v967, %v958
    %v1202 = vpack.c.b16 %v968, %v959
    %v1203 = vpack.c.b16 %v969, %v960
    %v1204 = vpack.c.b16 %v970, %v961
    %v1205 = vpack.c.b16 %v971, %v962
    %v1206 = vpack.c.b16 %v972, %v963
    %v1207 = vpack.c.b16 %v973, %v964
    %v1208 = vpack.c.b16 %v974, %v965
    %v1209 = vpack.c.b16 %v984, %v975
    %v1210 = vpack.c.b16 %v985, %v976
    %v1211 = vpack.c.b16 %v986, %v977
    %v1212 = vpack.c.b16 %v987, %v978
    %v1213 = vpack.c.b16 %v988, %v979
    %v1214 = vpack.c.b16 %v989, %v980
    %v1215 = vpack.c.b16 %v990, %v981
    %v1216 = vpack.c.b16 %v991, %v982
    %v1217 = vpack.c.b16 %v992, %v983
    %v1218 = vpack.c.b16 %v1002, %v993
    %v1219 = vpack.c.b16 %v1003, %v994
    %v1220 = vpack.c.b16 %v1004, %v995
    %v1221 = vpack.c.b16 %v1005, %v996
    %v1222 = vpack.c.b16 %v1006, %v997
    %v1223 = vpack.c.b16 %v1007, %v998
    %v1224 = vpack.c.b16 %v1008, %v999
    %v1225 = vpack.c.b16 %v1009, %v1000
    %v1226 = vpack.c.b16 %v1010, %v1001
    %1443 = vmatpush.bf16.msra.mxu0 %v1074
    %1444 = vmatpush.bf16.msra.mxu0 %v1065
    %1445 = vmatpush.bf16.msra.mxu0 %v1056
    %1446 = vmatpush.bf16.msra.mxu0 %v1047
    %1447 = vmatpush.bf16.msra.mxu0 %v1038
    %1448 = vmatpush.bf16.msra.mxu0 %v1029
    %1449 = vmatpush.bf16.msra.mxu0 %v1020
    %1450 = vmatpush.bf16.msra.mxu0 %v1011
    %1451 = vmatmul.bf16.gmra.mxu0 %v333
    %v1452 = vpop.f32.mrf.mxu0
    %v1453 = vadd.f32 0.0, %v1452
    %v1454 = vpop.f32.mrf.mxu0
    %v1455 = vadd.f32 0.0, %v1454
    %1456 = vdwg.mxu0
    %1457 = vmatpush.bf16.msra.mxu0 %v1146
    %1458 = vmatpush.bf16.msra.mxu0 %v1137
    %1459 = vmatpush.bf16.msra.mxu0 %v1128
    %1460 = vmatpush.bf16.msra.mxu0 %v1119
    %1461 = vmatpush.bf16.msra.mxu0 %v1110
    %1462 = vmatpush.bf16.msra.mxu0 %v1101
    %1463 = vmatpush.bf16.msra.mxu0 %v1092
    %1464 = vmatpush.bf16.msra.mxu0 %v1083
    %1465 = vmatmul.bf16.gmra.mxu0 %v334
    %v1466 = vpop.f32.mrf.mxu0
    %v1467 = vadd.f32 %v1453, %v1466
    %v1468 = vpop.f32.mrf.mxu0
    %v1469 = vadd.f32 %v1455, %v1468
    %1470 = vdwg.mxu0
    %1471 = vmatpush.bf16.msra.mxu0 %v1218
    %1472 = vmatpush.bf16.msra.mxu0 %v1209
    %1473 = vmatpush.bf16.msra.mxu0 %v1200
    %1474 = vmatpush.bf16.msra.mxu0 %v1191
    %1475 = vmatpush.bf16.msra.mxu0 %v1182
    %1476 = vmatpush.bf16.msra.mxu0 %v1173
    %1477 = vmatpush.bf16.msra.mxu0 %v1164
    %1478 = vmatpush.bf16.msra.mxu0 %v1155
    %1479 = vmatmul.bf16.gmra.mxu0 %v335
    %v1480 = vpop.f32.mrf.mxu0
    %v1481 = vadd.f32 %v1467, %v1480
    %v1482 = vpop.f32.mrf.mxu0
    %v1483 = vadd.f32 %v1469, %v1482
    %1484 = vdwg.mxu0
    %1485 = vmatpush.bf16.msra.mxu0 %v1075
    %1486 = vmatpush.bf16.msra.mxu0 %v1066
    %1487 = vmatpush.bf16.msra.mxu0 %v1057
    %1488 = vmatpush.bf16.msra.mxu0 %v1048
    %1489 = vmatpush.bf16.msra.mxu0 %v1039
    %1490 = vmatpush.bf16.msra.mxu0 %v1030
    %1491 = vmatpush.bf16.msra.mxu0 %v1021
    %1492 = vmatpush.bf16.msra.mxu0 %v1012
    %1493 = vmatmul.bf16.gmra.mxu0 %v333
    %v1494 = vpop.f32.mrf.mxu0
    %v1495 = vadd.f32 0.0, %v1494
    %v1496 = vpop.f32.mrf.mxu0
    %v1497 = vadd.f32 0.0, %v1496
    %1498 = vdwg.mxu0
    %1499 = vmatpush.bf16.msra.mxu0 %v1147
    %1500 = vmatpush.bf16.msra.mxu0 %v1138
    %1501 = vmatpush.bf16.msra.mxu0 %v1129
    %1502 = vmatpush.bf16.msra.mxu0 %v1120
    %1503 = vmatpush.bf16.msra.mxu0 %v1111
    %1504 = vmatpush.bf16.msra.mxu0 %v1102
    %1505 = vmatpush.bf16.msra.mxu0 %v1093
    %1506 = vmatpush.bf16.msra.mxu0 %v1084
    %1507 = vmatmul.bf16.gmra.mxu0 %v334
    %v1508 = vpop.f32.mrf.mxu0
    %v1509 = vadd.f32 %v1495, %v1508
    %v1510 = vpop.f32.mrf.mxu0
    %v1511 = vadd.f32 %v1497, %v1510
    %1512 = vdwg.mxu0
    %1513 = vmatpush.bf16.msra.mxu0 %v1219
    %1514 = vmatpush.bf16.msra.mxu0 %v1210
    %1515 = vmatpush.bf16.msra.mxu0 %v1201
    %1516 = vmatpush.bf16.msra.mxu0 %v1192
    %1517 = vmatpush.bf16.msra.mxu0 %v1183
    %1518 = vmatpush.bf16.msra.mxu0 %v1174
    %1519 = vmatpush.bf16.msra.mxu0 %v1165
    %1520 = vmatpush.bf16.msra.mxu0 %v1156
    %1521 = vmatmul.bf16.gmra.mxu0 %v335
    %v1522 = vpop.f32.mrf.mxu0
    %v1523 = vadd.f32 %v1509, %v1522
    %v1524 = vpop.f32.mrf.mxu0
    %v1525 = vadd.f32 %v1511, %v1524
    %1526 = vdwg.mxu0
    %1527 = vmatpush.bf16.msra.mxu0 %v1076
    %1528 = vmatpush.bf16.msra.mxu0 %v1067
    %1529 = vmatpush.bf16.msra.mxu0 %v1058
    %1530 = vmatpush.bf16.msra.mxu0 %v1049
    %1531 = vmatpush.bf16.msra.mxu0 %v1040
    %1532 = vmatpush.bf16.msra.mxu0 %v1031
    %1533 = vmatpush.bf16.msra.mxu0 %v1022
    %1534 = vmatpush.bf16.msra.mxu0 %v1013
    %1535 = vmatmul.bf16.gmra.mxu0 %v333
    %v1536 = vpop.f32.mrf.mxu0
    %v1537 = vadd.f32 0.0, %v1536
    %v1538 = vpop.f32.mrf.mxu0
    %v1539 = vadd.f32 0.0, %v1538
    %1540 = vdwg.mxu0
    %1541 = vmatpush.bf16.msra.mxu0 %v1148
    %1542 = vmatpush.bf16.msra.mxu0 %v1139
    %1543 = vmatpush.bf16.msra.mxu0 %v1130
    %1544 = vmatpush.bf16.msra.mxu0 %v1121
    %1545 = vmatpush.bf16.msra.mxu0 %v1112
    %1546 = vmatpush.bf16.msra.mxu0 %v1103
    %1547 = vmatpush.bf16.msra.mxu0 %v1094
    %1548 = vmatpush.bf16.msra.mxu0 %v1085
    %1549 = vmatmul.bf16.gmra.mxu0 %v334
    %v1550 = vpop.f32.mrf.mxu0
    %v1551 = vadd.f32 %v1537, %v1550
    %v1552 = vpop.f32.mrf.mxu0
    %v1553 = vadd.f32 %v1539, %v1552
    %1554 = vdwg.mxu0
    %1555 = vmatpush.bf16.msra.mxu0 %v1220
    %1556 = vmatpush.bf16.msra.mxu0 %v1211
    %1557 = vmatpush.bf16.msra.mxu0 %v1202
    %1558 = vmatpush.bf16.msra.mxu0 %v1193
    %1559 = vmatpush.bf16.msra.mxu0 %v1184
    %1560 = vmatpush.bf16.msra.mxu0 %v1175
    %1561 = vmatpush.bf16.msra.mxu0 %v1166
    %1562 = vmatpush.bf16.msra.mxu0 %v1157
    %1563 = vmatmul.bf16.gmra.mxu0 %v335
    %v1564 = vpop.f32.mrf.mxu0
    %v1565 = vadd.f32 %v1551, %v1564
    %v1566 = vpop.f32.mrf.mxu0
    %v1567 = vadd.f32 %v1553, %v1566
    %1568 = vdwg.mxu0
    %1569 = vmatpush.bf16.msra.mxu0 %v1077
    %1570 = vmatpush.bf16.msra.mxu0 %v1068
    %1571 = vmatpush.bf16.msra.mxu0 %v1059
    %1572 = vmatpush.bf16.msra.mxu0 %v1050
    %1573 = vmatpush.bf16.msra.mxu0 %v1041
    %1574 = vmatpush.bf16.msra.mxu0 %v1032
    %1575 = vmatpush.bf16.msra.mxu0 %v1023
    %1576 = vmatpush.bf16.msra.mxu0 %v1014
    %1577 = vmatmul.bf16.gmra.mxu0 %v333
    %v1578 = vpop.f32.mrf.mxu0
    %v1579 = vadd.f32 0.0, %v1578
    %v1580 = vpop.f32.mrf.mxu0
    %v1581 = vadd.f32 0.0, %v1580
    %1582 = vdwg.mxu0
    %1583 = vmatpush.bf16.msra.mxu0 %v1149
    %1584 = vmatpush.bf16.msra.mxu0 %v1140
    %1585 = vmatpush.bf16.msra.mxu0 %v1131
    %1586 = vmatpush.bf16.msra.mxu0 %v1122
    %1587 = vmatpush.bf16.msra.mxu0 %v1113
    %1588 = vmatpush.bf16.msra.mxu0 %v1104
    %1589 = vmatpush.bf16.msra.mxu0 %v1095
    %1590 = vmatpush.bf16.msra.mxu0 %v1086
    %1591 = vmatmul.bf16.gmra.mxu0 %v334
    %v1592 = vpop.f32.mrf.mxu0
    %v1593 = vadd.f32 %v1579, %v1592
    %v1594 = vpop.f32.mrf.mxu0
    %v1595 = vadd.f32 %v1581, %v1594
    %1596 = vdwg.mxu0
    %1597 = vmatpush.bf16.msra.mxu0 %v1221
    %1598 = vmatpush.bf16.msra.mxu0 %v1212
    %1599 = vmatpush.bf16.msra.mxu0 %v1203
    %1600 = vmatpush.bf16.msra.mxu0 %v1194
    %1601 = vmatpush.bf16.msra.mxu0 %v1185
    %1602 = vmatpush.bf16.msra.mxu0 %v1176
    %1603 = vmatpush.bf16.msra.mxu0 %v1167
    %1604 = vmatpush.bf16.msra.mxu0 %v1158
    %1605 = vmatmul.bf16.gmra.mxu0 %v335
    %v1606 = vpop.f32.mrf.mxu0
    %v1607 = vadd.f32 %v1593, %v1606
    %v1608 = vpop.f32.mrf.mxu0
    %v1609 = vadd.f32 %v1595, %v1608
    %1610 = vdwg.mxu0
    %1611 = vmatpush.bf16.msra.mxu0 %v1078
    %1612 = vmatpush.bf16.msra.mxu0 %v1069
    %1613 = vmatpush.bf16.msra.mxu0 %v1060
    %1614 = vmatpush.bf16.msra.mxu0 %v1051
    %1615 = vmatpush.bf16.msra.mxu0 %v1042
    %1616 = vmatpush.bf16.msra.mxu0 %v1033
    %1617 = vmatpush.bf16.msra.mxu0 %v1024
    %1618 = vmatpush.bf16.msra.mxu0 %v1015
    %1619 = vmatmul.bf16.gmra.mxu0 %v333
    %v1620 = vpop.f32.mrf.mxu0
    %v1621 = vadd.f32 0.0, %v1620
    %v1622 = vpop.f32.mrf.mxu0
    %v1623 = vadd.f32 0.0, %v1622
    %1624 = vdwg.mxu0
    %1625 = vmatpush.bf16.msra.mxu0 %v1150
    %1626 = vmatpush.bf16.msra.mxu0 %v1141
    %1627 = vmatpush.bf16.msra.mxu0 %v1132
    %1628 = vmatpush.bf16.msra.mxu0 %v1123
    %1629 = vmatpush.bf16.msra.mxu0 %v1114
    %1630 = vmatpush.bf16.msra.mxu0 %v1105
    %1631 = vmatpush.bf16.msra.mxu0 %v1096
    %1632 = vmatpush.bf16.msra.mxu0 %v1087
    %1633 = vmatmul.bf16.gmra.mxu0 %v334
    %v1634 = vpop.f32.mrf.mxu0
    %v1635 = vadd.f32 %v1621, %v1634
    %v1636 = vpop.f32.mrf.mxu0
    %v1637 = vadd.f32 %v1623, %v1636
    %1638 = vdwg.mxu0
    %1639 = vmatpush.bf16.msra.mxu0 %v1222
    %1640 = vmatpush.bf16.msra.mxu0 %v1213
    %1641 = vmatpush.bf16.msra.mxu0 %v1204
    %1642 = vmatpush.bf16.msra.mxu0 %v1195
    %1643 = vmatpush.bf16.msra.mxu0 %v1186
    %1644 = vmatpush.bf16.msra.mxu0 %v1177
    %1645 = vmatpush.bf16.msra.mxu0 %v1168
    %1646 = vmatpush.bf16.msra.mxu0 %v1159
    %1647 = vmatmul.bf16.gmra.mxu0 %v335
    %v1648 = vpop.f32.mrf.mxu0
    %v1649 = vadd.f32 %v1635, %v1648
    %v1650 = vpop.f32.mrf.mxu0
    %v1651 = vadd.f32 %v1637, %v1650
    %1652 = vdwg.mxu0
    %1653 = vmatpush.bf16.msra.mxu0 %v1079
    %1654 = vmatpush.bf16.msra.mxu0 %v1070
    %1655 = vmatpush.bf16.msra.mxu0 %v1061
    %1656 = vmatpush.bf16.msra.mxu0 %v1052
    %1657 = vmatpush.bf16.msra.mxu0 %v1043
    %1658 = vmatpush.bf16.msra.mxu0 %v1034
    %1659 = vmatpush.bf16.msra.mxu0 %v1025
    %1660 = vmatpush.bf16.msra.mxu0 %v1016
    %1661 = vmatmul.bf16.gmra.mxu0 %v333
    %v1662 = vpop.f32.mrf.mxu0
    %v1663 = vadd.f32 0.0, %v1662
    %v1664 = vpop.f32.mrf.mxu0
    %v1665 = vadd.f32 0.0, %v1664
    %1666 = vdwg.mxu0
    %1667 = vmatpush.bf16.msra.mxu0 %v1151
    %1668 = vmatpush.bf16.msra.mxu0 %v1142
    %1669 = vmatpush.bf16.msra.mxu0 %v1133
    %1670 = vmatpush.bf16.msra.mxu0 %v1124
    %1671 = vmatpush.bf16.msra.mxu0 %v1115
    %1672 = vmatpush.bf16.msra.mxu0 %v1106
    %1673 = vmatpush.bf16.msra.mxu0 %v1097
    %1674 = vmatpush.bf16.msra.mxu0 %v1088
    %1675 = vmatmul.bf16.gmra.mxu0 %v334
    %v1676 = vpop.f32.mrf.mxu0
    %v1677 = vadd.f32 %v1663, %v1676
    %v1678 = vpop.f32.mrf.mxu0
    %v1679 = vadd.f32 %v1665, %v1678
    %1680 = vdwg.mxu0
    %1681 = vmatpush.bf16.msra.mxu0 %v1223
    %1682 = vmatpush.bf16.msra.mxu0 %v1214
    %1683 = vmatpush.bf16.msra.mxu0 %v1205
    %1684 = vmatpush.bf16.msra.mxu0 %v1196
    %1685 = vmatpush.bf16.msra.mxu0 %v1187
    %1686 = vmatpush.bf16.msra.mxu0 %v1178
    %1687 = vmatpush.bf16.msra.mxu0 %v1169
    %1688 = vmatpush.bf16.msra.mxu0 %v1160
    %1689 = vmatmul.bf16.gmra.mxu0 %v335
    %v1690 = vpop.f32.mrf.mxu0
    %v1691 = vadd.f32 %v1677, %v1690
    %v1692 = vpop.f32.mrf.mxu0
    %v1693 = vadd.f32 %v1679, %v1692
    %1694 = vdwg.mxu0
    %1695 = vmatpush.bf16.msra.mxu0 %v1080
    %1696 = vmatpush.bf16.msra.mxu0 %v1071
    %1697 = vmatpush.bf16.msra.mxu0 %v1062
    %1698 = vmatpush.bf16.msra.mxu0 %v1053
    %1699 = vmatpush.bf16.msra.mxu0 %v1044
    %1700 = vmatpush.bf16.msra.mxu0 %v1035
    %1701 = vmatpush.bf16.msra.mxu0 %v1026
    %1702 = vmatpush.bf16.msra.mxu0 %v1017
    %1703 = vmatmul.bf16.gmra.mxu0 %v333
    %v1704 = vpop.f32.mrf.mxu0
    %v1705 = vadd.f32 0.0, %v1704
    %v1706 = vpop.f32.mrf.mxu0
    %v1707 = vadd.f32 0.0, %v1706
    %1708 = vdwg.mxu0
    %1709 = vmatpush.bf16.msra.mxu0 %v1152
    %1710 = vmatpush.bf16.msra.mxu0 %v1143
    %1711 = vmatpush.bf16.msra.mxu0 %v1134
    %1712 = vmatpush.bf16.msra.mxu0 %v1125
    %1713 = vmatpush.bf16.msra.mxu0 %v1116
    %1714 = vmatpush.bf16.msra.mxu0 %v1107
    %1715 = vmatpush.bf16.msra.mxu0 %v1098
    %1716 = vmatpush.bf16.msra.mxu0 %v1089
    %1717 = vmatmul.bf16.gmra.mxu0 %v334
    %v1718 = vpop.f32.mrf.mxu0
    %v1719 = vadd.f32 %v1705, %v1718
    %v1720 = vpop.f32.mrf.mxu0
    %v1721 = vadd.f32 %v1707, %v1720
    %1722 = vdwg.mxu0
    %1723 = vmatpush.bf16.msra.mxu0 %v1224
    %1724 = vmatpush.bf16.msra.mxu0 %v1215
    %1725 = vmatpush.bf16.msra.mxu0 %v1206
    %1726 = vmatpush.bf16.msra.mxu0 %v1197
    %1727 = vmatpush.bf16.msra.mxu0 %v1188
    %1728 = vmatpush.bf16.msra.mxu0 %v1179
    %1729 = vmatpush.bf16.msra.mxu0 %v1170
    %1730 = vmatpush.bf16.msra.mxu0 %v1161
    %1731 = vmatmul.bf16.gmra.mxu0 %v335
    %v1732 = vpop.f32.mrf.mxu0
    %v1733 = vadd.f32 %v1719, %v1732
    %v1734 = vpop.f32.mrf.mxu0
    %v1735 = vadd.f32 %v1721, %v1734
    %1736 = vdwg.mxu0
    %1737 = vmatpush.bf16.msra.mxu0 %v1081
    %1738 = vmatpush.bf16.msra.mxu0 %v1072
    %1739 = vmatpush.bf16.msra.mxu0 %v1063
    %1740 = vmatpush.bf16.msra.mxu0 %v1054
    %1741 = vmatpush.bf16.msra.mxu0 %v1045
    %1742 = vmatpush.bf16.msra.mxu0 %v1036
    %1743 = vmatpush.bf16.msra.mxu0 %v1027
    %1744 = vmatpush.bf16.msra.mxu0 %v1018
    %1745 = vmatmul.bf16.gmra.mxu0 %v333
    %v1746 = vpop.f32.mrf.mxu0
    %v1747 = vadd.f32 0.0, %v1746
    %v1748 = vpop.f32.mrf.mxu0
    %v1749 = vadd.f32 0.0, %v1748
    %1750 = vdwg.mxu0
    %1751 = vmatpush.bf16.msra.mxu0 %v1153
    %1752 = vmatpush.bf16.msra.mxu0 %v1144
    %1753 = vmatpush.bf16.msra.mxu0 %v1135
    %1754 = vmatpush.bf16.msra.mxu0 %v1126
    %1755 = vmatpush.bf16.msra.mxu0 %v1117
    %1756 = vmatpush.bf16.msra.mxu0 %v1108
    %1757 = vmatpush.bf16.msra.mxu0 %v1099
    %1758 = vmatpush.bf16.msra.mxu0 %v1090
    %1759 = vmatmul.bf16.gmra.mxu0 %v334
    %v1760 = vpop.f32.mrf.mxu0
    %v1761 = vadd.f32 %v1747, %v1760
    %v1762 = vpop.f32.mrf.mxu0
    %v1763 = vadd.f32 %v1749, %v1762
    %1764 = vdwg.mxu0
    %1765 = vmatpush.bf16.msra.mxu0 %v1225
    %1766 = vmatpush.bf16.msra.mxu0 %v1216
    %1767 = vmatpush.bf16.msra.mxu0 %v1207
    %1768 = vmatpush.bf16.msra.mxu0 %v1198
    %1769 = vmatpush.bf16.msra.mxu0 %v1189
    %1770 = vmatpush.bf16.msra.mxu0 %v1180
    %1771 = vmatpush.bf16.msra.mxu0 %v1171
    %1772 = vmatpush.bf16.msra.mxu0 %v1162
    %1773 = vmatmul.bf16.gmra.mxu0 %v335
    %v1774 = vpop.f32.mrf.mxu0
    %v1775 = vadd.f32 %v1761, %v1774
    %v1776 = vpop.f32.mrf.mxu0
    %v1777 = vadd.f32 %v1763, %v1776
    %1778 = vdwg.mxu0
    %1779 = vmatpush.bf16.msra.mxu0 %v1082
    %1780 = vmatpush.bf16.msra.mxu0 %v1073
    %1781 = vmatpush.bf16.msra.mxu0 %v1064
    %1782 = vmatpush.bf16.msra.mxu0 %v1055
    %1783 = vmatpush.bf16.msra.mxu0 %v1046
    %1784 = vmatpush.bf16.msra.mxu0 %v1037
    %1785 = vmatpush.bf16.msra.mxu0 %v1028
    %1786 = vmatpush.bf16.msra.mxu0 %v1019
    %1787 = vmatmul.bf16.gmra.mxu0 %v333
    %v1788 = vpop.f32.mrf.mxu0
    %v1789 = vadd.f32 0.0, %v1788
    %v1790 = vpop.f32.mrf.mxu0
    %v1791 = vadd.f32 0.0, %v1790
    %1792 = vdwg.mxu0
    %1793 = vmatpush.bf16.msra.mxu0 %v1154
    %1794 = vmatpush.bf16.msra.mxu0 %v1145
    %1795 = vmatpush.bf16.msra.mxu0 %v1136
    %1796 = vmatpush.bf16.msra.mxu0 %v1127
    %1797 = vmatpush.bf16.msra.mxu0 %v1118
    %1798 = vmatpush.bf16.msra.mxu0 %v1109
    %1799 = vmatpush.bf16.msra.mxu0 %v1100
    %1800 = vmatpush.bf16.msra.mxu0 %v1091
    %1801 = vmatmul.bf16.gmra.mxu0 %v334
    %v1802 = vpop.f32.mrf.mxu0
    %v1803 = vadd.f32 %v1789, %v1802
    %v1804 = vpop.f32.mrf.mxu0
    %v1805 = vadd.f32 %v1791, %v1804
    %1806 = vdwg.mxu0
    %1807 = vmatpush.bf16.msra.mxu0 %v1226
    %1808 = vmatpush.bf16.msra.mxu0 %v1217
    %1809 = vmatpush.bf16.msra.mxu0 %v1208
    %1810 = vmatpush.bf16.msra.mxu0 %v1199
    %1811 = vmatpush.bf16.msra.mxu0 %v1190
    %1812 = vmatpush.bf16.msra.mxu0 %v1181
    %1813 = vmatpush.bf16.msra.mxu0 %v1172
    %1814 = vmatpush.bf16.msra.mxu0 %v1163
    %1815 = vmatmul.bf16.gmra.mxu0 %v335
    %v1816 = vpop.f32.mrf.mxu0
    %v1817 = vadd.f32 %v1803, %v1816
    %v1818 = vpop.f32.mrf.mxu0
    %v1819 = vadd.f32 %v1805, %v1818
    %1820 = vdwg.mxu0
    %v1821 = vlaneseq
    %v1822 = vshrl.u32 %v1821, 7
    %v1823 = vlaneseq
    %v1824 = vand.u32 %v1823, 127
    %vm1825 = vcmp.ge.s32.totalorder %v1822, %v1824
    %vm1826 = vcmask 785408
    %v1828 = vsel %vm1826, %v1481, 0
    %v1831 = vsel %vm1826, %v1607, 0
    %1833 = vmatpush.xpose.msra.mxu0 0.0
    %1834 = vmatpush.xpose.msra.mxu0 0.0
    %1835 = vmatpush.xpose.msra.mxu0 0.0
    %1836 = vmatpush.xpose.msra.mxu0 0.0
    %1837 = vmatpush.xpose.msra.mxu0 0.0
    %1838 = vmatpush.xpose.msra.mxu0 0.0
    %1839 = vmatpush.xpose.msra.mxu0 0.0
    %1840 = vmatpush.xpose.msra.mxu0 0.0
    %1841 = vmatpush.xpose.msra.mxu0 0.0
    %1842 = vmatpush.xpose.msra.mxu0 0.0
    %1843 = vmatpush.xpose.msra.mxu0 0.0
    %1844 = vmatpush.xpose.msra.mxu0 0.0
    %1845 = vmatpush.xpose.msra.mxu0 0.0
    %1846 = vmatpush.xpose.msra.mxu0 0.0
    %1847 = vmatpush.xpose.msra.mxu0 0.0
    %1848 = vmatpush.xpose.msra.mxu0 %v1831
    %1849 = vmatmul.f32.gmra.mxu0 %v1828
    %v1850 = vpop.f32.mrf.mxu0
    %v1851 = vadd.f32 0.0, %v1850
    %1852 = vdwg.mxu0
    %v1853 = vsel %vm1825, %v1851, -inf
    %vm1854 = vcmask 64512
    %v1855 = vsel %vm1854, %v1853, -inf
    %1856 = vmax.xlane.f32.xlu0 %v1855
    %v1857 = vpop.xlane.xlu0 %1856
    %v1858 = vsub.f32 %v1853, %v1857
    %v1859 = vmul.f32 %v1858, 1.442695
    %v1860 = vpow.pop %v1859
    %v1861 = vsel %vm1854, %v1860, 0.0
    %1862 = vadd.xlane.f32.xlu0 %v1861
    %v1863 = vpop.xlane.xlu0 %1862
    %v1864 = vrcp.pop %v1863
    %v1865 = vmul.f32 %v1860, %v1864
    %v1867 = vsel %vm1854, %v1865, 0
    %1869 = vmatpush.msra.mxu0 0.0
    %1870 = vmatpush.msra.mxu0 0.0
    %1871 = vmatpush.msra.mxu0 0.0
    %1872 = vmatpush.msra.mxu0 0.0
    %1873 = vmatpush.msra.mxu0 0.0
    %1874 = vmatpush.msra.mxu0 0.0
    %1875 = vmatpush.msra.mxu0 0.0
    %1876 = vmatpush.msra.mxu0 0.0
    %1877 = vmatpush.msra.mxu0 0.0
    %1878 = vmatpush.msra.mxu0 0.0
    %1879 = vmatpush.msra.mxu0 0.0
    %1880 = vmatpush.msra.mxu0 0.0
    %1881 = vmatpush.msra.mxu0 0.0
    %1882 = vmatpush.msra.mxu0 0.0
    %1883 = vmatpush.msra.mxu0 0.0
    %1884 = vmatpush.msra.mxu0 %v1733
    %1885 = vmatmul.f32.gmra.mxu0 %v1867
    %v1886 = vpop.f32.mrf.mxu0
    %v1887 = vadd.f32 0.0, %v1886
    %1888 = vdwg.mxu0
    %1890 = vrot.lane.b32.xlu0 %v1481, 32
    %v1891 = vpop.permute.xlu0 %1890
    %1892 = vrot.lane.b32.xlu0 %v1523, 32
    %v1893 = vpop.permute.xlu0 %1892
    %vm1894 = vcmask 261120
    %v1895 = vsel %vm1894, %v1891, %v1893
    %1897 = vrot.lane.b32.xlu0 %v1607, 32
    %v1898 = vpop.permute.xlu0 %1897
    %1899 = vrot.lane.b32.xlu0 %v1649, 32
    %v1900 = vpop.permute.xlu0 %1899
    %v1901 = vsel %vm1894, %v1898, %v1900
    %v1902 = vsel %vm1826, %v1895, 0
    %v1904 = vsel %vm1826, %v1901, 0
    %1906 = vmatpush.xpose.msra.mxu0 0.0
    %1907 = vmatpush.xpose.msra.mxu0 0.0
    %1908 = vmatpush.xpose.msra.mxu0 0.0
    %1909 = vmatpush.xpose.msra.mxu0 0.0
    %1910 = vmatpush.xpose.msra.mxu0 0.0
    %1911 = vmatpush.xpose.msra.mxu0 0.0
    %1912 = vmatpush.xpose.msra.mxu0 0.0
    %1913 = vmatpush.xpose.msra.mxu0 0.0
    %1914 = vmatpush.xpose.msra.mxu0 0.0
    %1915 = vmatpush.xpose.msra.mxu0 0.0
    %1916 = vmatpush.xpose.msra.mxu0 0.0
    %1917 = vmatpush.xpose.msra.mxu0 0.0
    %1918 = vmatpush.xpose.msra.mxu0 0.0
    %1919 = vmatpush.xpose.msra.mxu0 0.0
    %1920 = vmatpush.xpose.msra.mxu0 0.0
    %1921 = vmatpush.xpose.msra.mxu0 %v1904
    %1922 = vmatmul.f32.gmra.mxu0 %v1902
    %v1923 = vpop.f32.mrf.mxu0
    %v1924 = vadd.f32 0.0, %v1923
    %1925 = vdwg.mxu0
    %v1926 = vsel %vm1825, %v1924, -inf
    %v1927 = vsel %vm1854, %v1926, -inf
    %1928 = vmax.xlane.f32.xlu0 %v1927
    %v1929 = vpop.xlane.xlu0 %1928
    %v1930 = vsub.f32 %v1926, %v1929
    %v1931 = vmul.f32 %v1930, 1.442695
    %v1932 = vpow.pop %v1931
    %v1933 = vsel %vm1854, %v1932, 0.0
    %1934 = vadd.xlane.f32.xlu0 %v1933
    %v1935 = vpop.xlane.xlu0 %1934
    %v1936 = vrcp.pop %v1935
    %v1937 = vmul.f32 %v1932, %v1936
    %1940 = vrot.lane.b32.xlu0 %v1733, 32
    %v1941 = vpop.permute.xlu0 %1940
    %1942 = vrot.lane.b32.xlu0 %v1775, 32
    %v1943 = vpop.permute.xlu0 %1942
    %v1944 = vsel %vm1894, %v1941, %v1943
    %v1947 = vsel %vm1854, %v1937, 0
    %1949 = vmatpush.msra.mxu0 0.0
    %1950 = vmatpush.msra.mxu0 0.0
    %1951 = vmatpush.msra.mxu0 0.0
    %1952 = vmatpush.msra.mxu0 0.0
    %1953 = vmatpush.msra.mxu0 0.0
    %1954 = vmatpush.msra.mxu0 0.0
    %1955 = vmatpush.msra.mxu0 0.0
    %1956 = vmatpush.msra.mxu0 0.0
    %1957 = vmatpush.msra.mxu0 0.0
    %1958 = vmatpush.msra.mxu0 0.0
    %1959 = vmatpush.msra.mxu0 0.0
    %1960 = vmatpush.msra.mxu0 0.0
    %1961 = vmatpush.msra.mxu0 0.0
    %1962 = vmatpush.msra.mxu0 0.0
    %1963 = vmatpush.msra.mxu0 0.0
    %1964 = vmatpush.msra.mxu0 %v1944
    %1965 = vmatmul.f32.gmra.mxu0 %v1947
    %v1966 = vpop.f32.mrf.mxu0
    %v1967 = vadd.f32 0.0, %v1966
    %1968 = vdwg.mxu0
    %1970 = vrot.lane.b32.xlu0 %v1523, 64
    %v1971 = vpop.permute.xlu0 %1970
    %1972 = vrot.lane.b32.xlu0 %v1565, 64
    %v1973 = vpop.permute.xlu0 %1972
    %vm1974 = vcmask 523264
    %v1975 = vsel %vm1974, %v1971, %v1973
    %1977 = vrot.lane.b32.xlu0 %v1649, 64
    %v1978 = vpop.permute.xlu0 %1977
    %1979 = vrot.lane.b32.xlu0 %v1691, 64
    %v1980 = vpop.permute.xlu0 %1979
    %v1981 = vsel %vm1974, %v1978, %v1980
    %v1982 = vsel %vm1826, %v1975, 0
    %v1984 = vsel %vm1826, %v1981, 0
    %1986 = vmatpush.xpose.msra.mxu0 0.0
    %1987 = vmatpush.xpose.msra.mxu0 0.0
    %1988 = vmatpush.xpose.msra.mxu0 0.0
    %1989 = vmatpush.xpose.msra.mxu0 0.0
    %1990 = vmatpush.xpose.msra.mxu0 0.0
    %1991 = vmatpush.xpose.msra.mxu0 0.0
    %1992 = vmatpush.xpose.msra.mxu0 0.0
    %1993 = vmatpush.xpose.msra.mxu0 0.0
    %1994 = vmatpush.xpose.msra.mxu0 0.0
    %1995 = vmatpush.xpose.msra.mxu0 0.0
    %1996 = vmatpush.xpose.msra.mxu0 0.0
    %1997 = vmatpush.xpose.msra.mxu0 0.0
    %1998 = vmatpush.xpose.msra.mxu0 0.0
    %1999 = vmatpush.xpose.msra.mxu0 0.0
    %2000 = vmatpush.xpose.msra.mxu0 0.0
    %2001 = vmatpush.xpose.msra.mxu0 %v1984
    %2002 = vmatmul.f32.gmra.mxu0 %v1982
    %v2003 = vpop.f32.mrf.mxu0
    %v2004 = vadd.f32 0.0, %v2003
    %2005 = vdwg.mxu0
    %v2006 = vsel %vm1825, %v2004, -inf
    %v2007 = vsel %vm1854, %v2006, -inf
    %2008 = vmax.xlane.f32.xlu0 %v2007
    %v2009 = vpop.xlane.xlu0 %2008
    %v2010 = vsub.f32 %v2006, %v2009
    %v2011 = vmul.f32 %v2010, 1.442695
    %v2012 = vpow.pop %v2011
    %v2013 = vsel %vm1854, %v2012, 0.0
    %2014 = vadd.xlane.f32.xlu0 %v2013
    %v2015 = vpop.xlane.xlu0 %2014
    %v2016 = vrcp.pop %v2015
    %v2017 = vmul.f32 %v2012, %v2016
    %2019 = vrot.lane.b32.xlu0 %v1775, 64
    %v2020 = vpop.permute.xlu0 %2019
    %2021 = vrot.lane.b32.xlu0 %v1817, 64
    %v2022 = vpop.permute.xlu0 %2021
    %v2023 = vsel %vm1974, %v2020, %v2022
    %v2026 = vsel %vm1854, %v2017, 0
    %2028 = vmatpush.msra.mxu0 0.0
    %2029 = vmatpush.msra.mxu0 0.0
    %2030 = vmatpush.msra.mxu0 0.0
    %2031 = vmatpush.msra.mxu0 0.0
    %2032 = vmatpush.msra.mxu0 0.0
    %2033 = vmatpush.msra.mxu0 0.0
    %2034 = vmatpush.msra.mxu0 0.0
    %2035 = vmatpush.msra.mxu0 0.0
    %2036 = vmatpush.msra.mxu0 0.0
    %2037 = vmatpush.msra.mxu0 0.0
    %2038 = vmatpush.msra.mxu0 0.0
    %2039 = vmatpush.msra.mxu0 0.0
    %2040 = vmatpush.msra.mxu0 0.0
    %2041 = vmatpush.msra.mxu0 0.0
    %2042 = vmatpush.msra.mxu0 0.0
    %2043 = vmatpush.msra.mxu0 %v2023
    %2044 = vmatmul.f32.gmra.mxu0 %v2026
    %v2045 = vpop.f32.mrf.mxu0
    %v2046 = vadd.f32 0.0, %v2045
    %2047 = vdwg.mxu0
    %2048 = vrot.lane.b32.xlu0 %v1565, 96
    %v2049 = vpop.permute.xlu0 %2048
    %2050 = vrot.lane.b32.xlu0 %v1691, 96
    %v2051 = vpop.permute.xlu0 %2050
    %v2052 = vsel %vm1826, %v2049, 0
    %v2054 = vsel %vm1826, %v2051, 0
    %2056 = vmatpush.xpose.msra.mxu0 0.0
    %2057 = vmatpush.xpose.msra.mxu0 0.0
    %2058 = vmatpush.xpose.msra.mxu0 0.0
    %2059 = vmatpush.xpose.msra.mxu0 0.0
    %2060 = vmatpush.xpose.msra.mxu0 0.0
    %2061 = vmatpush.xpose.msra.mxu0 0.0
    %2062 = vmatpush.xpose.msra.mxu0 0.0
    %2063 = vmatpush.xpose.msra.mxu0 0.0
    %2064 = vmatpush.xpose.msra.mxu0 0.0
    %2065 = vmatpush.xpose.msra.mxu0 0.0
    %2066 = vmatpush.xpose.msra.mxu0 0.0
    %2067 = vmatpush.xpose.msra.mxu0 0.0
    %2068 = vmatpush.xpose.msra.mxu0 0.0
    %2069 = vmatpush.xpose.msra.mxu0 0.0
    %2070 = vmatpush.xpose.msra.mxu0 0.0
    %2071 = vmatpush.xpose.msra.mxu0 %v2054
    %2072 = vmatmul.f32.gmra.mxu0 %v2052
    %v2073 = vpop.f32.mrf.mxu0
    %v2074 = vadd.f32 0.0, %v2073
    %2075 = vdwg.mxu0
    %v2076 = vsel %vm1825, %v2074, -inf
    %v2077 = vsel %vm1854, %v2076, -inf
    %2078 = vmax.xlane.f32.xlu0 %v2077
    %v2079 = vpop.xlane.xlu0 %2078
    %v2080 = vsub.f32 %v2076, %v2079
    %v2081 = vmul.f32 %v2080, 1.442695
    %v2082 = vpow.pop %v2081
    %v2083 = vsel %vm1854, %v2082, 0.0
    %2084 = vadd.xlane.f32.xlu0 %v2083
    %v2085 = vpop.xlane.xlu0 %2084
    %v2086 = vrcp.pop %v2085
    %v2087 = vmul.f32 %v2082, %v2086
    %2088 = vrot.lane.b32.xlu0 %v1817, 96
    %v2089 = vpop.permute.xlu0 %2088
    %v2092 = vsel %vm1854, %v2087, 0
    %2094 = vmatpush.msra.mxu0 0.0
    %2095 = vmatpush.msra.mxu0 0.0
    %2096 = vmatpush.msra.mxu0 0.0
    %2097 = vmatpush.msra.mxu0 0.0
    %2098 = vmatpush.msra.mxu0 0.0
    %2099 = vmatpush.msra.mxu0 0.0
    %2100 = vmatpush.msra.mxu0 0.0
    %2101 = vmatpush.msra.mxu0 0.0
    %2102 = vmatpush.msra.mxu0 0.0
    %2103 = vmatpush.msra.mxu0 0.0
    %2104 = vmatpush.msra.mxu0 0.0
    %2105 = vmatpush.msra.mxu0 0.0
    %2106 = vmatpush.msra.mxu0 0.0
    %2107 = vmatpush.msra.mxu0 0.0
    %2108 = vmatpush.msra.mxu0 0.0
    %2109 = vmatpush.msra.mxu0 %v2089
    %2110 = vmatmul.f32.gmra.mxu0 %v2092
    %v2111 = vpop.f32.mrf.mxu0
    %v2112 = vadd.f32 0.0, %v2111
    %2113 = vdwg.mxu0
    %2115 = vrot.lane.b32.xlu0 %v1967, 96
    %v2116 = vpop.permute.xlu0 %2115
    %2119 = vrot.lane.b32.xlu0 %v2046, 64
    %v2120 = vpop.permute.xlu0 %2119
    %2123 = vrot.lane.b32.xlu0 %v2112, 32
    %v2124 = vpop.permute.xlu0 %2123
    %v2126 = vsel %vm1826, %v1887, %v2116
    %v2127 = vsel %vm1974, %v2116, %v2120
    %v2128 = vsel %vm1894, %v2120, %v2124
    %v2130 = vsel %vm1826, %v1483, 0
    %v2133 = vsel %vm1826, %v1609, 0
    %2135 = vmatpush.xpose.msra.mxu0 0.0
    %2136 = vmatpush.xpose.msra.mxu0 0.0
    %2137 = vmatpush.xpose.msra.mxu0 0.0
    %2138 = vmatpush.xpose.msra.mxu0 0.0
    %2139 = vmatpush.xpose.msra.mxu0 0.0
    %2140 = vmatpush.xpose.msra.mxu0 0.0
    %2141 = vmatpush.xpose.msra.mxu0 0.0
    %2142 = vmatpush.xpose.msra.mxu0 0.0
    %2143 = vmatpush.xpose.msra.mxu0 0.0
    %2144 = vmatpush.xpose.msra.mxu0 0.0
    %2145 = vmatpush.xpose.msra.mxu0 0.0
    %2146 = vmatpush.xpose.msra.mxu0 0.0
    %2147 = vmatpush.xpose.msra.mxu0 0.0
    %2148 = vmatpush.xpose.msra.mxu0 0.0
    %2149 = vmatpush.xpose.msra.mxu0 0.0
    %2150 = vmatpush.xpose.msra.mxu0 %v2133
    %2151 = vmatmul.f32.gmra.mxu0 %v2130
    %v2152 = vpop.f32.mrf.mxu0
    %v2153 = vadd.f32 0.0, %v2152
    %2154 = vdwg.mxu0
    %v2155 = vsel %vm1825, %v2153, -inf
    %v2156 = vsel %vm1854, %v2155, -inf
    %2157 = vmax.xlane.f32.xlu0 %v2156
    %v2158 = vpop.xlane.xlu0 %2157
    %v2159 = vsub.f32 %v2155, %v2158
    %v2160 = vmul.f32 %v2159, 1.442695
    %v2161 = vpow.pop %v2160
    %v2162 = vsel %vm1854, %v2161, 0.0
    %2163 = vadd.xlane.f32.xlu0 %v2162
    %v2164 = vpop.xlane.xlu0 %2163
    %v2165 = vrcp.pop %v2164
    %v2166 = vmul.f32 %v2161, %v2165
    %v2168 = vsel %vm1854, %v2166, 0
    %2170 = vmatpush.msra.mxu0 0.0
    %2171 = vmatpush.msra.mxu0 0.0
    %2172 = vmatpush.msra.mxu0 0.0
    %2173 = vmatpush.msra.mxu0 0.0
    %2174 = vmatpush.msra.mxu0 0.0
    %2175 = vmatpush.msra.mxu0 0.0
    %2176 = vmatpush.msra.mxu0 0.0
    %2177 = vmatpush.msra.mxu0 0.0
    %2178 = vmatpush.msra.mxu0 0.0
    %2179 = vmatpush.msra.mxu0 0.0
    %2180 = vmatpush.msra.mxu0 0.0
    %2181 = vmatpush.msra.mxu0 0.0
    %2182 = vmatpush.msra.mxu0 0.0
    %2183 = vmatpush.msra.mxu0 0.0
    %2184 = vmatpush.msra.mxu0 0.0
    %2185 = vmatpush.msra.mxu0 %v1735
    %2186 = vmatmul.f32.gmra.mxu0 %v2168
    %v2187 = vpop.f32.mrf.mxu0
    %v2188 = vadd.f32 0.0, %v2187
    %2189 = vdwg.mxu0
    %2191 = vrot.lane.b32.xlu0 %v1483, 32
    %v2192 = vpop.permute.xlu0 %2191
    %2193 = vrot.lane.b32.xlu0 %v1525, 32
    %v2194 = vpop.permute.xlu0 %2193
    %v2195 = vsel %vm1894, %v2192, %v2194
    %2197 = vrot.lane.b32.xlu0 %v1609, 32
    %v2198 = vpop.permute.xlu0 %2197
    %2199 = vrot.lane.b32.xlu0 %v1651, 32
    %v2200 = vpop.permute.xlu0 %2199
    %v2201 = vsel %vm1894, %v2198, %v2200
    %v2202 = vsel %vm1826, %v2195, 0
    %v2204 = vsel %vm1826, %v2201, 0
    %2206 = vmatpush.xpose.msra.mxu0 0.0
    %2207 = vmatpush.xpose.msra.mxu0 0.0
    %2208 = vmatpush.xpose.msra.mxu0 0.0
    %2209 = vmatpush.xpose.msra.mxu0 0.0
    %2210 = vmatpush.xpose.msra.mxu0 0.0
    %2211 = vmatpush.xpose.msra.mxu0 0.0
    %2212 = vmatpush.xpose.msra.mxu0 0.0
    %2213 = vmatpush.xpose.msra.mxu0 0.0
    %2214 = vmatpush.xpose.msra.mxu0 0.0
    %2215 = vmatpush.xpose.msra.mxu0 0.0
    %2216 = vmatpush.xpose.msra.mxu0 0.0
    %2217 = vmatpush.xpose.msra.mxu0 0.0
    %2218 = vmatpush.xpose.msra.mxu0 0.0
    %2219 = vmatpush.xpose.msra.mxu0 0.0
    %2220 = vmatpush.xpose.msra.mxu0 0.0
    %2221 = vmatpush.xpose.msra.mxu0 %v2204
    %2222 = vmatmul.f32.gmra.mxu0 %v2202
    %v2223 = vpop.f32.mrf.mxu0
    %v2224 = vadd.f32 0.0, %v2223
    %2225 = vdwg.mxu0
    %v2226 = vsel %vm1825, %v2224, -inf
    %v2227 = vsel %vm1854, %v2226, -inf
    %2228 = vmax.xlane.f32.xlu0 %v2227
    %v2229 = vpop.xlane.xlu0 %2228
    %v2230 = vsub.f32 %v2226, %v2229
    %v2231 = vmul.f32 %v2230, 1.442695
    %v2232 = vpow.pop %v2231
    %v2233 = vsel %vm1854, %v2232, 0.0
    %2234 = vadd.xlane.f32.xlu0 %v2233
    %v2235 = vpop.xlane.xlu0 %2234
    %v2236 = vrcp.pop %v2235
    %v2237 = vmul.f32 %v2232, %v2236
    %2240 = vrot.lane.b32.xlu0 %v1735, 32
    %v2241 = vpop.permute.xlu0 %2240
    %2242 = vrot.lane.b32.xlu0 %v1777, 32
    %v2243 = vpop.permute.xlu0 %2242
    %v2244 = vsel %vm1894, %v2241, %v2243
    %v2247 = vsel %vm1854, %v2237, 0
    %2249 = vmatpush.msra.mxu0 0.0
    %2250 = vmatpush.msra.mxu0 0.0
    %2251 = vmatpush.msra.mxu0 0.0
    %2252 = vmatpush.msra.mxu0 0.0
    %2253 = vmatpush.msra.mxu0 0.0
    %2254 = vmatpush.msra.mxu0 0.0
    %2255 = vmatpush.msra.mxu0 0.0
    %2256 = vmatpush.msra.mxu0 0.0
    %2257 = vmatpush.msra.mxu0 0.0
    %2258 = vmatpush.msra.mxu0 0.0
    %2259 = vmatpush.msra.mxu0 0.0
    %2260 = vmatpush.msra.mxu0 0.0
    %2261 = vmatpush.msra.mxu0 0.0
    %2262 = vmatpush.msra.mxu0 0.0
    %2263 = vmatpush.msra.mxu0 0.0
    %2264 = vmatpush.msra.mxu0 %v2244
    %2265 = vmatmul.f32.gmra.mxu0 %v2247
    %v2266 = vpop.f32.mrf.mxu0
    %v2267 = vadd.f32 0.0, %v2266
    %2268 = vdwg.mxu0
    %2270 = vrot.lane.b32.xlu0 %v1525, 64
    %v2271 = vpop.permute.xlu0 %2270
    %2272 = vrot.lane.b32.xlu0 %v1567, 64
    %v2273 = vpop.permute.xlu0 %2272
    %v2274 = vsel %vm1974, %v2271, %v2273
    %2276 = vrot.lane.b32.xlu0 %v1651, 64
    %v2277 = vpop.permute.xlu0 %2276
    %2278 = vrot.lane.b32.xlu0 %v1693, 64
    %v2279 = vpop.permute.xlu0 %2278
    %v2280 = vsel %vm1974, %v2277, %v2279
    %v2281 = vsel %vm1826, %v2274, 0
    %v2283 = vsel %vm1826, %v2280, 0
    %2285 = vmatpush.xpose.msra.mxu0 0.0
    %2286 = vmatpush.xpose.msra.mxu0 0.0
    %2287 = vmatpush.xpose.msra.mxu0 0.0
    %2288 = vmatpush.xpose.msra.mxu0 0.0
    %2289 = vmatpush.xpose.msra.mxu0 0.0
    %2290 = vmatpush.xpose.msra.mxu0 0.0
    %2291 = vmatpush.xpose.msra.mxu0 0.0
    %2292 = vmatpush.xpose.msra.mxu0 0.0
    %2293 = vmatpush.xpose.msra.mxu0 0.0
    %2294 = vmatpush.xpose.msra.mxu0 0.0
    %2295 = vmatpush.xpose.msra.mxu0 0.0
    %2296 = vmatpush.xpose.msra.mxu0 0.0
    %2297 = vmatpush.xpose.msra.mxu0 0.0
    %2298 = vmatpush.xpose.msra.mxu0 0.0
    %2299 = vmatpush.xpose.msra.mxu0 0.0
    %2300 = vmatpush.xpose.msra.mxu0 %v2283
    %2301 = vmatmul.f32.gmra.mxu0 %v2281
    %v2302 = vpop.f32.mrf.mxu0
    %v2303 = vadd.f32 0.0, %v2302
    %2304 = vdwg.mxu0
    %v2305 = vsel %vm1825, %v2303, -inf
    %v2306 = vsel %vm1854, %v2305, -inf
    %2307 = vmax.xlane.f32.xlu0 %v2306
    %v2308 = vpop.xlane.xlu0 %2307
    %v2309 = vsub.f32 %v2305, %v2308
    %v2310 = vmul.f32 %v2309, 1.442695
    %v2311 = vpow.pop %v2310
    %v2312 = vsel %vm1854, %v2311, 0.0
    %2313 = vadd.xlane.f32.xlu0 %v2312
    %v2314 = vpop.xlane.xlu0 %2313
    %v2315 = vrcp.pop %v2314
    %v2316 = vmul.f32 %v2311, %v2315
    %2318 = vrot.lane.b32.xlu0 %v1777, 64
    %v2319 = vpop.permute.xlu0 %2318
    %2320 = vrot.lane.b32.xlu0 %v1819, 64
    %v2321 = vpop.permute.xlu0 %2320
    %v2322 = vsel %vm1974, %v2319, %v2321
    %v2325 = vsel %vm1854, %v2316, 0
    %2327 = vmatpush.msra.mxu0 0.0
    %2328 = vmatpush.msra.mxu0 0.0
    %2329 = vmatpush.msra.mxu0 0.0
    %2330 = vmatpush.msra.mxu0 0.0
    %2331 = vmatpush.msra.mxu0 0.0
    %2332 = vmatpush.msra.mxu0 0.0
    %2333 = vmatpush.msra.mxu0 0.0
    %2334 = vmatpush.msra.mxu0 0.0
    %2335 = vmatpush.msra.mxu0 0.0
    %2336 = vmatpush.msra.mxu0 0.0
    %2337 = vmatpush.msra.mxu0 0.0
    %2338 = vmatpush.msra.mxu0 0.0
    %2339 = vmatpush.msra.mxu0 0.0
    %2340 = vmatpush.msra.mxu0 0.0
    %2341 = vmatpush.msra.mxu0 0.0
    %2342 = vmatpush.msra.mxu0 %v2322
    %2343 = vmatmul.f32.gmra.mxu0 %v2325
    %v2344 = vpop.f32.mrf.mxu0
    %v2345 = vadd.f32 0.0, %v2344
    %2346 = vdwg.mxu0
    %2347 = vrot.lane.b32.xlu0 %v1567, 96
    %v2348 = vpop.permute.xlu0 %2347
    %2349 = vrot.lane.b32.xlu0 %v1693, 96
    %v2350 = vpop.permute.xlu0 %2349
    %v2351 = vsel %vm1826, %v2348, 0
    %v2353 = vsel %vm1826, %v2350, 0
    %2355 = vmatpush.xpose.msra.mxu0 0.0
    %2356 = vmatpush.xpose.msra.mxu0 0.0
    %2357 = vmatpush.xpose.msra.mxu0 0.0
    %2358 = vmatpush.xpose.msra.mxu0 0.0
    %2359 = vmatpush.xpose.msra.mxu0 0.0
    %2360 = vmatpush.xpose.msra.mxu0 0.0
    %2361 = vmatpush.xpose.msra.mxu0 0.0
    %2362 = vmatpush.xpose.msra.mxu0 0.0
    %2363 = vmatpush.xpose.msra.mxu0 0.0
    %2364 = vmatpush.xpose.msra.mxu0 0.0
    %2365 = vmatpush.xpose.msra.mxu0 0.0
    %2366 = vmatpush.xpose.msra.mxu0 0.0
    %2367 = vmatpush.xpose.msra.mxu0 0.0
    %2368 = vmatpush.xpose.msra.mxu0 0.0
    %2369 = vmatpush.xpose.msra.mxu0 0.0
    %2370 = vmatpush.xpose.msra.mxu0 %v2353
    %2371 = vmatmul.f32.gmra.mxu0 %v2351
    %v2372 = vpop.f32.mrf.mxu0
    %v2373 = vadd.f32 0.0, %v2372
    %2374 = vdwg.mxu0
    %v2375 = vsel %vm1825, %v2373, -inf
    %v2376 = vsel %vm1854, %v2375, -inf
    %2377 = vmax.xlane.f32.xlu0 %v2376
    %v2378 = vpop.xlane.xlu0 %2377
    %v2379 = vsub.f32 %v2375, %v2378
    %v2380 = vmul.f32 %v2379, 1.442695
    %v2381 = vpow.pop %v2380
    %v2382 = vsel %vm1854, %v2381, 0.0
    %2383 = vadd.xlane.f32.xlu0 %v2382
    %v2384 = vpop.xlane.xlu0 %2383
    %v2385 = vrcp.pop %v2384
    %v2386 = vmul.f32 %v2381, %v2385
    %2387 = vrot.lane.b32.xlu0 %v1819, 96
    %v2388 = vpop.permute.xlu0 %2387
    %v2391 = vsel %vm1854, %v2386, 0
    %2393 = vmatpush.msra.mxu0 0.0
    %2394 = vmatpush.msra.mxu0 0.0
    %2395 = vmatpush.msra.mxu0 0.0
    %2396 = vmatpush.msra.mxu0 0.0
    %2397 = vmatpush.msra.mxu0 0.0
    %2398 = vmatpush.msra.mxu0 0.0
    %2399 = vmatpush.msra.mxu0 0.0
    %2400 = vmatpush.msra.mxu0 0.0
    %2401 = vmatpush.msra.mxu0 0.0
    %2402 = vmatpush.msra.mxu0 0.0
    %2403 = vmatpush.msra.mxu0 0.0
    %2404 = vmatpush.msra.mxu0 0.0
    %2405 = vmatpush.msra.mxu0 0.0
    %2406 = vmatpush.msra.mxu0 0.0
    %2407 = vmatpush.msra.mxu0 0.0
    %2408 = vmatpush.msra.mxu0 %v2388
    %2409 = vmatmul.f32.gmra.mxu0 %v2391
    %v2410 = vpop.f32.mrf.mxu0
    %v2411 = vadd.f32 0.0, %v2410
    %2412 = vdwg.mxu0
    %2414 = vrot.lane.b32.xlu0 %v2267, 96
    %v2415 = vpop.permute.xlu0 %2414
    %2418 = vrot.lane.b32.xlu0 %v2345, 64
    %v2419 = vpop.permute.xlu0 %2418
    %2422 = vrot.lane.b32.xlu0 %v2411, 32
    %v2423 = vpop.permute.xlu0 %2422
    %v2425 = vsel %vm1826, %v2188, %v2415
    %v2426 = vsel %vm1974, %v2415, %v2419
    %v2427 = vsel %vm1894, %v2419, %v2423
    %v2428 = vpack.c.bf16 %v2425, %v2126
    %v2429 = vpack.c.bf16 %v2426, %v2127
    %v2430 = vpack.c.bf16 %v2427, %v2128
    %v2431 = vld [vmem:[#allocation7] sm:$0xff]
    %v2432 = vld [vmem:[#allocation7 + $0x8] sm:$0xf]
    %v2433 = vld [vmem:[#allocation7 + $0xc] sm:$0xff]
    %v2434 = vld [vmem:[#allocation7 + $0x14] sm:$0xf]
    %v2435 = vld [vmem:[#allocation7 + $0x18] sm:$0xff]
    %v2436 = vld [vmem:[#allocation7 + $0x20] sm:$0xf]
    %v2437 = vld [vmem:[#allocation7 + $0x24] sm:$0xff]
    %v2438 = vld [vmem:[#allocation7 + $0x2c] sm:$0xf]
    %v2439 = vld [vmem:[#allocation7 + $0x30] sm:$0xff]
    %v2440 = vld [vmem:[#allocation7 + $0x38] sm:$0xf]
    %v2441 = vld [vmem:[#allocation7 + $0x3c] sm:$0xff]
    %v2442 = vld [vmem:[#allocation7 + $0x44] sm:$0xf]
    %v2443 = vld [vmem:[#allocation7 + $0x48] sm:$0xff]
    %v2444 = vld [vmem:[#allocation7 + $0x50] sm:$0xf]
    %v2445 = vld [vmem:[#allocation7 + $0x54] sm:$0xff]
    %v2446 = vld [vmem:[#allocation7 + $0x5c] sm:$0xf]
    %v2447 = vld [vmem:[#allocation7 + $0x60] sm:$0xff]
    %v2448 = vld [vmem:[#allocation7 + $0x68] sm:$0xf]
    %v2449 = vld [vmem:[#allocation7 + $0x6c] sm:$0xff]
    %v2450 = vld [vmem:[#allocation7 + $0x74] sm:$0xf]
    %v2451 = vld [vmem:[#allocation7 + $0x78] sm:$0xff]
    %v2452 = vld [vmem:[#allocation7 + $0x80] sm:$0xf]
    %v2453 = vld [vmem:[#allocation7 + $0x84] sm:$0xff]
    %v2454 = vld [vmem:[#allocation7 + $0x8c] sm:$0xf]
    %v2455 = vld [vmem:[#allocation7 + $0x90] sm:$0xff]
    %v2456 = vld [vmem:[#allocation7 + $0x98] sm:$0xf]
    %v2457 = vld [vmem:[#allocation7 + $0x9c] sm:$0xff]
    %v2458 = vld [vmem:[#allocation7 + $0xa4] sm:$0xf]
    %v2459 = vld [vmem:[#allocation7 + $0xa8] sm:$0xff]
    %v2460 = vld [vmem:[#allocation7 + $0xb0] sm:$0xf]
    %v2461 = vld [vmem:[#allocation7 + $0xb4] sm:$0xff]
    %v2462 = vld [vmem:[#allocation7 + $0xbc] sm:$0xf]
    %v2463 = vld [vmem:[#allocation7 + $0xc0] sm:$0xff]
    %v2464 = vld [vmem:[#allocation7 + $0xc8] sm:$0xf]
    %v2465 = vld [vmem:[#allocation7 + $0xcc] sm:$0xff]
    %v2466 = vld [vmem:[#allocation7 + $0xd4] sm:$0xf]
    %v2467 = vld [vmem:[#allocation7 + $0xd8] sm:$0xff]
    %v2468 = vld [vmem:[#allocation7 + $0xe0] sm:$0xf]
    %v2469 = vld [vmem:[#allocation7 + $0xe4] sm:$0xff]
    %v2470 = vld [vmem:[#allocation7 + $0xec] sm:$0xf]
    %v2471 = vld [vmem:[#allocation7 + $0xf0] sm:$0xff]
    %v2472 = vld [vmem:[#allocation7 + $0xf8] sm:$0xf]
    %v2473 = vld [vmem:[#allocation7 + $0xfc] sm:$0xff]
    %v2474 = vld [vmem:[#allocation7 + $0x104] sm:$0xf]
    %v2475 = vld [vmem:[#allocation7 + $0x108] sm:$0xff]
    %v2476 = vld [vmem:[#allocation7 + $0x110] sm:$0xf]
    %v2477 = vld [vmem:[#allocation7 + $0x114] sm:$0xff]
    %v2478 = vld [vmem:[#allocation7 + $0x11c] sm:$0xf]
    %v2479 = vld [vmem:[#allocation7 + $0x120] sm:$0xff]
    %v2480 = vld [vmem:[#allocation7 + $0x128] sm:$0xf]
    %v2481 = vld [vmem:[#allocation7 + $0x12c] sm:$0xff]
    %v2482 = vld [vmem:[#allocation7 + $0x134] sm:$0xf]
    %v2483 = vld [vmem:[#allocation7 + $0x138] sm:$0xff]
    %v2484 = vld [vmem:[#allocation7 + $0x140] sm:$0xf]
    %v2485 = vld [vmem:[#allocation7 + $0x144] sm:$0xff]
    %v2486 = vld [vmem:[#allocation7 + $0x14c] sm:$0xf]
    %v2487 = vld [vmem:[#allocation7 + $0x150] sm:$0xff]
    %v2488 = vld [vmem:[#allocation7 + $0x158] sm:$0xf]
    %v2489 = vld [vmem:[#allocation7 + $0x15c] sm:$0xff]
    %v2490 = vld [vmem:[#allocation7 + $0x164] sm:$0xf]
    %v2491 = vld [vmem:[#allocation7 + $0x168] sm:$0xff]
    %v2492 = vld [vmem:[#allocation7 + $0x170] sm:$0xf]
    %v2493 = vld [vmem:[#allocation7 + $0x174] sm:$0xff]
    %v2494 = vld [vmem:[#allocation7 + $0x17c] sm:$0xf]
    %v2495 = vld [vmem:[#allocation7 + $0x180] sm:$0xff]
    %v2496 = vld [vmem:[#allocation7 + $0x188] sm:$0xf]
    %v2497 = vld [vmem:[#allocation7 + $0x18c] sm:$0xff]
    %v2498 = vld [vmem:[#allocation7 + $0x194] sm:$0xf]
    %v2499 = vld [vmem:[#allocation7 + $0x198] sm:$0xff]
    %v2500 = vld [vmem:[#allocation7 + $0x1a0] sm:$0xf]
    %v2501 = vld [vmem:[#allocation7 + $0x1a4] sm:$0xff]
    %v2502 = vld [vmem:[#allocation7 + $0x1ac] sm:$0xf]
    %v2503 = vld [vmem:[#allocation7 + $0x1b0] sm:$0xff]
    %v2504 = vld [vmem:[#allocation7 + $0x1b8] sm:$0xf]
    %v2505 = vld [vmem:[#allocation7 + $0x1bc] sm:$0xff]
    %v2506 = vld [vmem:[#allocation7 + $0x1c4] sm:$0xf]
    %v2507 = vld [vmem:[#allocation7 + $0x1c8] sm:$0xff]
    %v2508 = vld [vmem:[#allocation7 + $0x1d0] sm:$0xf]
    %v2509 = vld [vmem:[#allocation7 + $0x1d4] sm:$0xff]
    %v2510 = vld [vmem:[#allocation7 + $0x1dc] sm:$0xf]
    %v2511 = vld [vmem:[#allocation7 + $0x1e0] sm:$0xff]
    %v2512 = vld [vmem:[#allocation7 + $0x1e8] sm:$0xf]
    %v2513 = vld [vmem:[#allocation7 + $0x1ec] sm:$0xff]
    %v2514 = vld [vmem:[#allocation7 + $0x1f4] sm:$0xf]
    %v2515 = vld [vmem:[#allocation7 + $0x1f8] sm:$0xff]
    %v2516 = vld [vmem:[#allocation7 + $0x200] sm:$0xf]
    %v2517 = vld [vmem:[#allocation7 + $0x204] sm:$0xff]
    %v2518 = vld [vmem:[#allocation7 + $0x20c] sm:$0xf]
    %v2519 = vld [vmem:[#allocation7 + $0x210] sm:$0xff]
    %v2520 = vld [vmem:[#allocation7 + $0x218] sm:$0xf]
    %v2521 = vld [vmem:[#allocation7 + $0x21c] sm:$0xff]
    %v2522 = vld [vmem:[#allocation7 + $0x224] sm:$0xf]
    %v2523 = vld [vmem:[#allocation7 + $0x228] sm:$0xff]
    %v2524 = vld [vmem:[#allocation7 + $0x230] sm:$0xf]
    %v2525 = vld [vmem:[#allocation7 + $0x234] sm:$0xff]
    %v2526 = vld [vmem:[#allocation7 + $0x23c] sm:$0xf]
    %v2527 = vld [vmem:[#allocation8] sm:$0x7]
    %v2529 = vperm.slane %v2527, 0
    %v2530 = vperm.slane %v2527, 1
    %v2531 = vperm.slane %v2527, 2
    %v2631 = vunpack.c.l.b16 %v2431
    %v2632 = vunpack.c.h.b16 %v2431
    %v2633 = vunpack.c.l.b16 %v2432
    %v2634 = vunpack.c.l.b16 %v2433
    %v2635 = vunpack.c.h.b16 %v2433
    %v2636 = vunpack.c.l.b16 %v2434
    %v2637 = vunpack.c.l.b16 %v2435
    %v2638 = vunpack.c.h.b16 %v2435
    %v2639 = vunpack.c.l.b16 %v2436
    %v2640 = vunpack.c.l.b16 %v2437
    %v2641 = vunpack.c.h.b16 %v2437
    %v2642 = vunpack.c.l.b16 %v2438
    %v2643 = vunpack.c.l.b16 %v2439
    %v2644 = vunpack.c.h.b16 %v2439
    %v2645 = vunpack.c.l.b16 %v2440
    %v2646 = vunpack.c.l.b16 %v2441
    %v2647 = vunpack.c.h.b16 %v2441
    %v2648 = vunpack.c.l.b16 %v2442
    %v2649 = vunpack.c.l.b16 %v2443
    %v2650 = vunpack.c.h.b16 %v2443
    %v2651 = vunpack.c.l.b16 %v2444
    %v2652 = vunpack.c.l.b16 %v2445
    %v2653 = vunpack.c.h.b16 %v2445
    %v2654 = vunpack.c.l.b16 %v2446
    %v2655 = vunpack.c.l.b16 %v2447
    %v2656 = vunpack.c.h.b16 %v2447
    %v2657 = vunpack.c.l.b16 %v2448
    %v2658 = vunpack.c.l.b16 %v2449
    %v2659 = vunpack.c.h.b16 %v2449
    %v2660 = vunpack.c.l.b16 %v2450
    %v2661 = vunpack.c.l.b16 %v2451
    %v2662 = vunpack.c.h.b16 %v2451
    %v2663 = vunpack.c.l.b16 %v2452
    %v2664 = vunpack.c.l.b16 %v2453
    %v2665 = vunpack.c.h.b16 %v2453
    %v2666 = vunpack.c.l.b16 %v2454
    %v2667 = vunpack.c.l.b16 %v2455
    %v2668 = vunpack.c.h.b16 %v2455
    %v2669 = vunpack.c.l.b16 %v2456
    %v2670 = vunpack.c.l.b16 %v2457
    %v2671 = vunpack.c.h.b16 %v2457
    %v2672 = vunpack.c.l.b16 %v2458
    %v2673 = vunpack.c.l.b16 %v2459
    %v2674 = vunpack.c.h.b16 %v2459
    %v2675 = vunpack.c.l.b16 %v2460
    %v2676 = vunpack.c.l.b16 %v2461
    %v2677 = vunpack.c.h.b16 %v2461
    %v2678 = vunpack.c.l.b16 %v2462
    %v2679 = vunpack.c.l.b16 %v2463
    %v2680 = vunpack.c.h.b16 %v2463
    %v2681 = vunpack.c.l.b16 %v2464
    %v2682 = vunpack.c.l.b16 %v2465
    %v2683 = vunpack.c.h.b16 %v2465
    %v2684 = vunpack.c.l.b16 %v2466
    %v2685 = vunpack.c.l.b16 %v2467
    %v2686 = vunpack.c.h.b16 %v2467
    %v2687 = vunpack.c.l.b16 %v2468
    %v2688 = vunpack.c.l.b16 %v2469
    %v2689 = vunpack.c.h.b16 %v2469
    %v2690 = vunpack.c.l.b16 %v2470
    %v2691 = vunpack.c.l.b16 %v2471
    %v2692 = vunpack.c.h.b16 %v2471
    %v2693 = vunpack.c.l.b16 %v2472
    %v2694 = vunpack.c.l.b16 %v2473
    %v2695 = vunpack.c.h.b16 %v2473
    %v2696 = vunpack.c.l.b16 %v2474
    %v2697 = vunpack.c.l.b16 %v2475
    %v2698 = vunpack.c.h.b16 %v2475
    %v2699 = vunpack.c.l.b16 %v2476
    %v2700 = vunpack.c.l.b16 %v2477
    %v2701 = vunpack.c.h.b16 %v2477
    %v2702 = vunpack.c.l.b16 %v2478
    %v2703 = vunpack.c.l.b16 %v2479
    %v2704 = vunpack.c.h.b16 %v2479
    %v2705 = vunpack.c.l.b16 %v2480
    %v2706 = vunpack.c.l.b16 %v2481
    %v2707 = vunpack.c.h.b16 %v2481
    %v2708 = vunpack.c.l.b16 %v2482
    %v2709 = vunpack.c.l.b16 %v2483
    %v2710 = vunpack.c.h.b16 %v2483
    %v2711 = vunpack.c.l.b16 %v2484
    %v2712 = vunpack.c.l.b16 %v2485
    %v2713 = vunpack.c.h.b16 %v2485
    %v2714 = vunpack.c.l.b16 %v2486
    %v2715 = vunpack.c.l.b16 %v2487
    %v2716 = vunpack.c.h.b16 %v2487
    %v2717 = vunpack.c.l.b16 %v2488
    %v2718 = vunpack.c.l.b16 %v2489
    %v2719 = vunpack.c.h.b16 %v2489
    %v2720 = vunpack.c.l.b16 %v2490
    %v2721 = vunpack.c.l.b16 %v2491
    %v2722 = vunpack.c.h.b16 %v2491
    %v2723 = vunpack.c.l.b16 %v2492
    %v2724 = vunpack.c.l.b16 %v2493
    %v2725 = vunpack.c.h.b16 %v2493
    %v2726 = vunpack.c.l.b16 %v2494
    %v2727 = vunpack.c.l.b16 %v2495
    %v2728 = vunpack.c.h.b16 %v2495
    %v2729 = vunpack.c.l.b16 %v2496
    %v2730 = vunpack.c.l.b16 %v2497
    %v2731 = vunpack.c.h.b16 %v2497
    %v2732 = vunpack.c.l.b16 %v2498
    %v2733 = vunpack.c.l.b16 %v2499
    %v2734 = vunpack.c.h.b16 %v2499
    %v2735 = vunpack.c.l.b16 %v2500
    %v2736 = vunpack.c.l.b16 %v2501
    %v2737 = vunpack.c.h.b16 %v2501
    %v2738 = vunpack.c.l.b16 %v2502
    %v2739 = vunpack.c.l.b16 %v2503
    %v2740 = vunpack.c.h.b16 %v2503
    %v2741 = vunpack.c.l.b16 %v2504
    %v2742 = vunpack.c.l.b16 %v2505
    %v2743 = vunpack.c.h.b16 %v2505
    %v2744 = vunpack.c.l.b16 %v2506
    %v2745 = vunpack.c.l.b16 %v2507
    %v2746 = vunpack.c.h.b16 %v2507
    %v2747 = vunpack.c.l.b16 %v2508
    %v2748 = vunpack.c.l.b16 %v2509
    %v2749 = vunpack.c.h.b16 %v2509
    %v2750 = vunpack.c.l.b16 %v2510
    %v2751 = vunpack.c.l.b16 %v2511
    %v2752 = vunpack.c.h.b16 %v2511
    %v2753 = vunpack.c.l.b16 %v2512
    %v2754 = vunpack.c.l.b16 %v2513
    %v2755 = vunpack.c.h.b16 %v2513
    %v2756 = vunpack.c.l.b16 %v2514
    %v2757 = vunpack.c.l.b16 %v2515
    %v2758 = vunpack.c.h.b16 %v2515
    %v2759 = vunpack.c.l.b16 %v2516
    %v2760 = vunpack.c.l.b16 %v2517
    %v2761 = vunpack.c.h.b16 %v2517
    %v2762 = vunpack.c.l.b16 %v2518
    %v2763 = vunpack.c.l.b16 %v2519
    %v2764 = vunpack.c.h.b16 %v2519
    %v2765 = vunpack.c.l.b16 %v2520
    %v2766 = vunpack.c.l.b16 %v2521
    %v2767 = vunpack.c.h.b16 %v2521
    %v2768 = vunpack.c.l.b16 %v2522
    %v2769 = vunpack.c.l.b16 %v2523
    %v2770 = vunpack.c.h.b16 %v2523
    %v2771 = vunpack.c.l.b16 %v2524
    %v2772 = vunpack.c.l.b16 %v2525
    %v2773 = vunpack.c.h.b16 %v2525
    %v2774 = vunpack.c.l.b16 %v2526
    %v2775 = vpack.c.b16 %v2634, %v2631
    %v2776 = vpack.c.b16 %v2635, %v2632
    %v2777 = vpack.c.b16 %v2636, %v2633
    %v2778 = vpack.c.b16 %v2640, %v2637
    %v2779 = vpack.c.b16 %v2641, %v2638
    %v2780 = vpack.c.b16 %v2642, %v2639
    %v2781 = vpack.c.b16 %v2646, %v2643
    %v2782 = vpack.c.b16 %v2647, %v2644
    %v2783 = vpack.c.b16 %v2648, %v2645
    %v2784 = vpack.c.b16 %v2652, %v2649
    %v2785 = vpack.c.b16 %v2653, %v2650
    %v2786 = vpack.c.b16 %v2654, %v2651
    %v2787 = vpack.c.b16 %v2658, %v2655
    %v2788 = vpack.c.b16 %v2659, %v2656
    %v2789 = vpack.c.b16 %v2660, %v2657
    %v2790 = vpack.c.b16 %v2664, %v2661
    %v2791 = vpack.c.b16 %v2665, %v2662
    %v2792 = vpack.c.b16 %v2666, %v2663
    %v2793 = vpack.c.b16 %v2670, %v2667
    %v2794 = vpack.c.b16 %v2671, %v2668
    %v2795 = vpack.c.b16 %v2672, %v2669
    %v2796 = vpack.c.b16 %v2676, %v2673
    %v2797 = vpack.c.b16 %v2677, %v2674
    %v2798 = vpack.c.b16 %v2678, %v2675
    %v2799 = vpack.c.b16 %v2682, %v2679
    %v2800 = vpack.c.b16 %v2683, %v2680
    %v2801 = vpack.c.b16 %v2684, %v2681
    %v2802 = vpack.c.b16 %v2688, %v2685
    %v2803 = vpack.c.b16 %v2689, %v2686
    %v2804 = vpack.c.b16 %v2690, %v2687
    %v2805 = vpack.c.b16 %v2694, %v2691
    %v2806 = vpack.c.b16 %v2695, %v2692
    %v2807 = vpack.c.b16 %v2696, %v2693
    %v2808 = vpack.c.b16 %v2700, %v2697
    %v2809 = vpack.c.b16 %v2701, %v2698
    %v2810 = vpack.c.b16 %v2702, %v2699
    %v2811 = vpack.c.b16 %v2706, %v2703
    %v2812 = vpack.c.b16 %v2707, %v2704
    %v2813 = vpack.c.b16 %v2708, %v2705
    %v2814 = vpack.c.b16 %v2712, %v2709
    %v2815 = vpack.c.b16 %v2713, %v2710
    %v2816 = vpack.c.b16 %v2714, %v2711
    %v2817 = vpack.c.b16 %v2718, %v2715
    %v2818 = vpack.c.b16 %v2719, %v2716
    %v2819 = vpack.c.b16 %v2720, %v2717
    %v2820 = vpack.c.b16 %v2724, %v2721
    %v2821 = vpack.c.b16 %v2725, %v2722
    %v2822 = vpack.c.b16 %v2726, %v2723
    %v2823 = vpack.c.b16 %v2730, %v2727
    %v2824 = vpack.c.b16 %v2731, %v2728
    %v2825 = vpack.c.b16 %v2732, %v2729
    %v2826 = vpack.c.b16 %v2736, %v2733
    %v2827 = vpack.c.b16 %v2737, %v2734
    %v2828 = vpack.c.b16 %v2738, %v2735
    %v2829 = vpack.c.b16 %v2742, %v2739
    %v2830 = vpack.c.b16 %v2743, %v2740
    %v2831 = vpack.c.b16 %v2744, %v2741
    %v2832 = vpack.c.b16 %v2748, %v2745
    %v2833 = vpack.c.b16 %v2749, %v2746
    %v2834 = vpack.c.b16 %v2750, %v2747
    %v2835 = vpack.c.b16 %v2754, %v2751
    %v2836 = vpack.c.b16 %v2755, %v2752
    %v2837 = vpack.c.b16 %v2756, %v2753
    %v2838 = vpack.c.b16 %v2760, %v2757
    %v2839 = vpack.c.b16 %v2761, %v2758
    %v2840 = vpack.c.b16 %v2762, %v2759
    %v2841 = vpack.c.b16 %v2766, %v2763
    %v2842 = vpack.c.b16 %v2767, %v2764
    %v2843 = vpack.c.b16 %v2768, %v2765
    %v2844 = vpack.c.b16 %v2772, %v2769
    %v2845 = vpack.c.b16 %v2773, %v2770
    %v2846 = vpack.c.b16 %v2774, %v2771
    %2919 = vmatpush.bf16.msra.mxu0 %v2796
    %2920 = vmatpush.bf16.msra.mxu0 %v2793
    %2921 = vmatpush.bf16.msra.mxu0 %v2790
    %2922 = vmatpush.bf16.msra.mxu0 %v2787
    %2923 = vmatpush.bf16.msra.mxu0 %v2784
    %2924 = vmatpush.bf16.msra.mxu0 %v2781
    %2925 = vmatpush.bf16.msra.mxu0 %v2778
    %2926 = vmatpush.bf16.msra.mxu0 %v2775
    %2927 = vmatmul.bf16.gmra.mxu0 %v2428
    %v2928 = vpop.f32.mrf.mxu0
    %v2929 = vadd.f32 %v2529, %v2928
    %v2930 = vpop.f32.mrf.mxu0
    %v2931 = vadd.f32 %v2529, %v2930
    %2932 = vdwg.mxu0
    %2933 = vmatpush.bf16.msra.mxu0 %v2820
    %2934 = vmatpush.bf16.msra.mxu0 %v2817
    %2935 = vmatpush.bf16.msra.mxu0 %v2814
    %2936 = vmatpush.bf16.msra.mxu0 %v2811
    %2937 = vmatpush.bf16.msra.mxu0 %v2808
    %2938 = vmatpush.bf16.msra.mxu0 %v2805
    %2939 = vmatpush.bf16.msra.mxu0 %v2802
    %2940 = vmatpush.bf16.msra.mxu0 %v2799
    %2941 = vmatmul.bf16.gmra.mxu0 %v2429
    %v2942 = vpop.f32.mrf.mxu0
    %v2943 = vadd.f32 %v2929, %v2942
    %v2944 = vpop.f32.mrf.mxu0
    %v2945 = vadd.f32 %v2931, %v2944
    %2946 = vdwg.mxu0
    %2947 = vmatpush.bf16.msra.mxu0 %v2844
    %2948 = vmatpush.bf16.msra.mxu0 %v2841
    %2949 = vmatpush.bf16.msra.mxu0 %v2838
    %2950 = vmatpush.bf16.msra.mxu0 %v2835
    %2951 = vmatpush.bf16.msra.mxu0 %v2832
    %2952 = vmatpush.bf16.msra.mxu0 %v2829
    %2953 = vmatpush.bf16.msra.mxu0 %v2826
    %2954 = vmatpush.bf16.msra.mxu0 %v2823
    %2955 = vmatmul.bf16.gmra.mxu0 %v2430
    %v2956 = vpop.f32.mrf.mxu0
    %v2957 = vadd.f32 %v2943, %v2956
    %v2958 = vpop.f32.mrf.mxu0
    %v2959 = vadd.f32 %v2945, %v2958
    %2960 = vdwg.mxu0
    %2961 = vmatpush.bf16.msra.mxu0 %v2797
    %2962 = vmatpush.bf16.msra.mxu0 %v2794
    %2963 = vmatpush.bf16.msra.mxu0 %v2791
    %2964 = vmatpush.bf16.msra.mxu0 %v2788
    %2965 = vmatpush.bf16.msra.mxu0 %v2785
    %2966 = vmatpush.bf16.msra.mxu0 %v2782
    %2967 = vmatpush.bf16.msra.mxu0 %v2779
    %2968 = vmatpush.bf16.msra.mxu0 %v2776
    %2969 = vmatmul.bf16.gmra.mxu0 %v2428
    %v2970 = vpop.f32.mrf.mxu0
    %v2971 = vadd.f32 %v2530, %v2970
    %v2972 = vpop.f32.mrf.mxu0
    %v2973 = vadd.f32 %v2530, %v2972
    %2974 = vdwg.mxu0
    %2975 = vmatpush.bf16.msra.mxu0 %v2821
    %2976 = vmatpush.bf16.msra.mxu0 %v2818
    %2977 = vmatpush.bf16.msra.mxu0 %v2815
    %2978 = vmatpush.bf16.msra.mxu0 %v2812
    %2979 = vmatpush.bf16.msra.mxu0 %v2809
    %2980 = vmatpush.bf16.msra.mxu0 %v2806
    %2981 = vmatpush.bf16.msra.mxu0 %v2803
    %2982 = vmatpush.bf16.msra.mxu0 %v2800
    %2983 = vmatmul.bf16.gmra.mxu0 %v2429
    %v2984 = vpop.f32.mrf.mxu0
    %v2985 = vadd.f32 %v2971, %v2984
    %v2986 = vpop.f32.mrf.mxu0
    %v2987 = vadd.f32 %v2973, %v2986
    %2988 = vdwg.mxu0
    %2989 = vmatpush.bf16.msra.mxu0 %v2845
    %2990 = vmatpush.bf16.msra.mxu0 %v2842
    %2991 = vmatpush.bf16.msra.mxu0 %v2839
    %2992 = vmatpush.bf16.msra.mxu0 %v2836
    %2993 = vmatpush.bf16.msra.mxu0 %v2833
    %2994 = vmatpush.bf16.msra.mxu0 %v2830
    %2995 = vmatpush.bf16.msra.mxu0 %v2827
    %2996 = vmatpush.bf16.msra.mxu0 %v2824
    %2997 = vmatmul.bf16.gmra.mxu0 %v2430
    %v2998 = vpop.f32.mrf.mxu0
    %v2999 = vadd.f32 %v2985, %v2998
    %v3000 = vpop.f32.mrf.mxu0
    %v3001 = vadd.f32 %v2987, %v3000
    %3002 = vdwg.mxu0
    %3003 = vmatpush.bf16.msra.mxu0 %v2798
    %3004 = vmatpush.bf16.msra.mxu0 %v2795
    %3005 = vmatpush.bf16.msra.mxu0 %v2792
    %3006 = vmatpush.bf16.msra.mxu0 %v2789
    %3007 = vmatpush.bf16.msra.mxu0 %v2786
    %3008 = vmatpush.bf16.msra.mxu0 %v2783
    %3009 = vmatpush.bf16.msra.mxu0 %v2780
    %3010 = vmatpush.bf16.msra.mxu0 %v2777
    %3011 = vmatmul.bf16.gmra.mxu0 %v2428
    %v3012 = vpop.f32.mrf.mxu0
    %v3013 = vadd.f32 %v2531, %v3012
    %v3014 = vpop.f32.mrf.mxu0
    %v3015 = vadd.f32 %v2531, %v3014
    %3016 = vdwg.mxu0
    %3017 = vmatpush.bf16.msra.mxu0 %v2822
    %3018 = vmatpush.bf16.msra.mxu0 %v2819
    %3019 = vmatpush.bf16.msra.mxu0 %v2816
    %3020 = vmatpush.bf16.msra.mxu0 %v2813
    %3021 = vmatpush.bf16.msra.mxu0 %v2810
    %3022 = vmatpush.bf16.msra.mxu0 %v2807
    %3023 = vmatpush.bf16.msra.mxu0 %v2804
    %3024 = vmatpush.bf16.msra.mxu0 %v2801
    %3025 = vmatmul.bf16.gmra.mxu0 %v2429
    %v3026 = vpop.f32.mrf.mxu0
    %v3027 = vadd.f32 %v3013, %v3026
    %v3028 = vpop.f32.mrf.mxu0
    %v3029 = vadd.f32 %v3015, %v3028
    %3030 = vdwg.mxu0
    %3031 = vmatpush.bf16.msra.mxu0 %v2846
    %3032 = vmatpush.bf16.msra.mxu0 %v2843
    %3033 = vmatpush.bf16.msra.mxu0 %v2840
    %3034 = vmatpush.bf16.msra.mxu0 %v2837
    %3035 = vmatpush.bf16.msra.mxu0 %v2834
    %3036 = vmatpush.bf16.msra.mxu0 %v2831
    %3037 = vmatpush.bf16.msra.mxu0 %v2828
    %3038 = vmatpush.bf16.msra.mxu0 %v2825
    %3039 = vmatmul.bf16.gmra.mxu0 %v2430
    %v3040 = vpop.f32.mrf.mxu0
    %v3041 = vadd.f32 %v3027, %v3040
    %v3042 = vpop.f32.mrf.mxu0
    %v3043 = vadd.f32 %v3029, %v3042
    %3044 = vdwg.mxu0
    %v3045 = vpack.c.bf16 %v2999, %v2957
    %v3046 = vpack.c.bf16 %v3041, %v3041
    %v3047 = vpack.c.bf16 %v3001, %v2959
    %v3048 = vpack.c.bf16 %v3043, %v3043
    %3049 = vst [vmem:[#allocation10] sm:$0xff] %v3045
    %3050 = vst [vmem:[#allocation10 + $0x8] sm:$0xf] %v3046
    %3051 = vst [vmem:[#allocation10 + $0xc] sm:$0xff] %v3047
    %3052 = vst [vmem:[#allocation10 + $0x14] sm:$0xf] %v3048
    // Predicated region
    $region34: #{tpu_custom_call.1} parent=1 // pred_check
      _
    $region35: #{tpu_custom_call.1} parent=1 // pred_check_branch
      %3054 = sbr.rel (0) target = $region37
    $region36: #{tpu_custom_call.1} parent=1 // pred_region
      %3056 = vsyncadd [#allocation4], 0
      %s3057 = sshll.u32 [#allocation10], 4
      %s3058 = int_to_ptr.vmem [resolvable:$true] %s3057
      %s3059 = sshll.u32 %s4, 4
      %s3060 = int_to_ptr.hbm [resolvable:$true] %s3059
      %3065 = dma.vmem_to_hbm [thread:$0]  %s3058, 384, %s3060, [#allocation4], 192, 192, 12
    $region37: #{tpu_custom_call.1} parent=1 // pred_fallthru
      _
    // Predicated region
    $region38: #{tpu_custom_call.1} parent=1 // pred_check
      _
    $region39: #{tpu_custom_call.1} parent=1 // pred_check_branch
      %3067 = sbr.rel (0) target = $region41
    $region40: #{tpu_custom_call.1} parent=1 // pred_region
      %3069 = dma.done [#allocation4], 384
    $region41: #{tpu_custom_call.1} parent=1 // pred_fallthru
      _
    %3070 = vsyncpa [#allocation3], 1
    %3071 = vsyncpa [#allocation6], 1
    %3072 = vsyncpa [#allocation9], 1
    %3073 = vsyncpa [#allocation4], 1

</llo_original>
